<compile_context>
chip_gen: v7x
topology: tpu7x:2x2x1
jax: 0.10.0
libtpu: 0.0.40
codegen_flags: <defaults>
</compile_context>

<pallas_src>
import functools

import jax
import jax.numpy as jnp
from jax.experimental import pallas as pl
from jax.experimental.pallas import tpu as pltpu


def _linear_relu_kernel(x_ref, w_ref, b_ref, o_ref):
    """o = relu(x @ w + b); x cast to bf16 in-kernel, w bf16, f32 accumulate + epilogue."""
    x = x_ref[...].astype(jnp.bfloat16)
    acc = jnp.dot(x, w_ref[...], preferred_element_type=jnp.float32)
    o_ref[...] = jnp.maximum(acc + b_ref[...], 0.0).astype(o_ref.dtype)


def _linear_relu_int8_kernel(x_ref, w_ref, s_ref, b_ref, o_ref):
    """o = relu((x @ w_int8) * scale + b).

    Per-output-channel scale is applied to the f32 accumulator *before* the bias add,
    which is mathematically identical to dequantizing the weight first (scale is per
    output column).  int8 values are exact in bf16, so the MXU runs bf16 x bf16.
    """
    x = x_ref[...].astype(jnp.bfloat16)
    w = w_ref[...].astype(jnp.bfloat16)
    acc = jnp.dot(x, w, preferred_element_type=jnp.float32)
    o_ref[...] = jnp.maximum(acc * s_ref[...] + b_ref[...], 0.0).astype(o_ref.dtype)


@functools.partial(jax.jit, static_argnames=("block_n",))
def linear_relu_pallas(x, w, b2d, w_scale2d=None, *, block_n=None):
    """y = relu(x @ w (+dequant) + b) as a single Pallas block (or optional N-split grid).

    x: [B, K] (any float dtype; cast to bf16 in-kernel)
    w: [K, N] bf16            (or int8 when w_scale2d is given)
    w_scale2d: None or [1, N] f32 per-output-channel dequant scales
    b2d: [1, N] f32
    returns [B, N] f32
    """
    B, K = x.shape
    Kw, N = w.shape
    assert K == Kw and b2d.shape == (1, N)

    quantized = w_scale2d is not None
    kernel = _linear_relu_int8_kernel if quantized else _linear_relu_kernel
    operands = (x, w, w_scale2d, b2d) if quantized else (x, w, b2d)

    in_bytes = sum(a.size * a.dtype.itemsize for a in operands)
    cost = pl.CostEstimate(
        flops=2 * B * K * N,
        transcendentals=0,
        bytes_accessed=in_bytes + B * N * 4,
    )
    out_shape = jax.ShapeDtypeStruct((B, N), jnp.float32)

    if block_n is None:
        # Gridless: one kernel invocation, operands copied to VMEM exactly once
        # (single-buffered), no pipeline machinery.  Best default on v5e/v6e/v7x.
        return pl.pallas_call(
            kernel,
            out_shape=out_shape,
            cost_estimate=cost,
        )(*operands)

    # Optional N-split "parallel" grid -- only worth benchmarking on v7x (2 TCs/chip).
    assert N % block_n == 0 and block_n % 128 == 0
    col_spec = pl.BlockSpec((1, block_n), lambda j: (0, j))
    in_specs = [
        pl.BlockSpec((B, K), lambda j: (0, 0)),        # x: full K every block
        pl.BlockSpec((K, block_n), lambda j: (0, j)),  # weight column slab
    ]
    if quantized:
        in_specs.append(col_spec)                      # per-channel scales
    in_specs.append(col_spec)                          # bias slab
    return pl.pallas_call(
        kernel,
        out_shape=out_shape,
        grid_spec=pltpu.PrefetchScalarGridSpec(
            num_scalar_prefetch=0,
            grid=(N // block_n,),
            in_specs=in_specs,
            out_specs=pl.BlockSpec((B, block_n), lambda j: (0, j)),  # lane-dense output
        ),
        compiler_params=pltpu.CompilerParams(dimension_semantics=("parallel",)),
        cost_estimate=cost,
    )(*operands)


class LangGoalEncoderPallas:
    """JAX/Pallas port of LangGoalEncoder (the trainable Linear(1024->512)+ReLU head).

    weight_quant:
      "bf16" (default) -- safe/fast on every generation (v5e/v6e/v7x).
      "int8"           -- per-output-channel int8 weight + f32 scales; halves the dominant
                          HBM weight read (recommended for v5e/v6e; harmless on v7x since
                          the MXU still runs bf16).
    block_n: None (default) single block; 256 is a measured option on v7x only.
    """

    def __init__(self, feature_size=512, clip_dim=1024, seed=0,
                 block_n=None, weight_quant="bf16"):
        self.feature_size = feature_size
        self.clip_dim = clip_dim
        self.block_n = block_n
        key = jax.random.PRNGKey(seed)
        kw, kb = jax.random.split(key)
        # PyTorch nn.Linear default init: U(-1/sqrt(in), 1/sqrt(in)).
        bound = 1.0 / jnp.sqrt(jnp.float32(clip_dim))
        w_f32 = jax.random.uniform(
            kw, (clip_dim, feature_size), jnp.float32, -bound, bound
        )  # stored pre-transposed [K, N]
        self.bias = jax.random.uniform(kb, (feature_size,), jnp.float32, -bound, bound)
        self.bias2d = self.bias.reshape(1, feature_size)  # precomputed once (no per-call op)

        if weight_quant == "int8":
            s = jnp.max(jnp.abs(w_f32), axis=0, keepdims=True) / 127.0   # [1, N]
            s = jnp.maximum(s, jnp.float32(1e-12))
            self.weight = jnp.clip(jnp.round(w_f32 / s), -127, 127).astype(jnp.int8)
            self.w_scale = s
        else:
            self.weight = w_f32.astype(jnp.bfloat16)
            self.w_scale = None

    def __call__(self, goals):
        if isinstance(goals, dict):
            goals_clip = goals["clip"]
        else:
            # TODO(synk): frozen CLIP RN50 text-encoder path (encode_text on integer
            # tokens) requires pretrained weights; not reproducible synthetically.
            raise NotImplementedError("Token path requires the frozen CLIP text encoder.")
        # Pass goals_clip as-is; the bf16 cast happens inside the kernel.
        return linear_relu_pallas(
            goals_clip, self.weight, self.bias2d, self.w_scale, block_n=self.block_n
        )


if __name__ == "__main__":
    key = jax.random.PRNGKey(0)
    B, CLIP_DIM, FEAT = 2, 1024, 512  # dims implied by nn.Linear(1024, 512)
    goals_clip = jax.random.normal(key, (B, CLIP_DIM), jnp.float32)
    x_bf = goals_clip.astype(jnp.bfloat16).astype(jnp.float32)  # what the kernel sees

    # Default bf16-weight path (safe on every TPU generation, incl. v7x).
    enc = LangGoalEncoderPallas(feature_size=FEAT, clip_dim=CLIP_DIM, seed=0)
    out = jax.block_until_ready(enc({"clip": goals_clip}))
    ref = jnp.maximum(x_bf @ enc.weight.astype(jnp.float32) + enc.bias, 0.0)
    assert out.shape == (B, FEAT)
    assert jnp.allclose(out, ref, atol=2e-3, rtol=2e-3)

    # Optional int8-weight path (halves the HBM weight read; intended for v5e/v6e).
    enc_q = LangGoalEncoderPallas(
        feature_size=FEAT, clip_dim=CLIP_DIM, seed=0, weight_quant="int8"
    )
    out_q = jax.block_until_ready(enc_q({"clip": goals_clip}))
    w_deq = enc_q.weight.astype(jnp.float32) * enc_q.w_scale  # dequantized reference weight
    ref_q = jnp.maximum(x_bf @ w_deq + enc_q.bias, 0.0)
    assert out_q.shape == (B, FEAT)
    assert jnp.allclose(out_q, ref_q, atol=5e-3, rtol=5e-3)

    print("KERNEL_OK")
</pallas_src>

<mosaic_0001>
module attributes {stable_mosaic.version = 11 : i64} {
  func.func @_linear_relu_kernel(%arg0: memref<2x1024xf32, #tpu.memory_space<vmem>>, %arg1: memref<1024x512xbf16, #tpu.memory_space<vmem>>, %arg2: memref<1x512xf32, #tpu.memory_space<vmem>>, %arg3: memref<2x512xf32, #tpu.memory_space<vmem>>) attributes {dimension_semantics = [], scalar_prefetch = 0 : i64, scratch_operands = 0 : i64, tpu.core_type = #tpu.core_type<tc>} {
    %c0 = arith.constant 0 : index
    %c0_0 = arith.constant 0 : index
    %0 = vector.load %arg0[%c0, %c0_0] : memref<2x1024xf32, #tpu.memory_space<vmem>>, vector<2x1024xf32>
    %1 = arith.truncf %0 : vector<2x1024xf32> to vector<2x1024xbf16>
    %c0_1 = arith.constant 0 : index
    %c0_2 = arith.constant 0 : index
    %2 = vector.load %arg1[%c0_1, %c0_2] : memref<1024x512xbf16, #tpu.memory_space<vmem>>, vector<1024x512xbf16>
    %cst = arith.constant dense<0.000000e+00> : vector<2x512xf32>
    %3 = tpu.matmul %1, %2, %cst {dimension_numbers = #tpu.dot_dimension_numbers<[1], [0], [0], [1], [0, 0, 1, 1], [], []>} : vector<2x1024xbf16>, vector<1024x512xbf16>, vector<2x512xf32> -> vector<2x512xf32>
    %c0_3 = arith.constant 0 : index
    %c0_4 = arith.constant 0 : index
    %4 = vector.load %arg2[%c0_3, %c0_4] : memref<1x512xf32, #tpu.memory_space<vmem>>, vector<1x512xf32>
    %5 = vector.broadcast %4 : vector<1x512xf32> to vector<2x512xf32>
    %6 = arith.addf %3, %5 : vector<2x512xf32>
    %cst_5 = arith.constant 0.000000e+00 : f32
    %7 = vector.broadcast %cst_5 : f32 to vector<2x512xf32>
    %8 = arith.maximumf %6, %7 : vector<2x512xf32>
    %c0_6 = arith.constant 0 : index
    %c0_7 = arith.constant 0 : index
    %9 = vector.load %arg3[%c0_6, %c0_7] : memref<2x512xf32, #tpu.memory_space<vmem>>, vector<2x512xf32>
    tpu.vector_store %arg3[%c0_6, %c0_7], %8 {strides = array<i32>} : memref<2x512xf32, #tpu.memory_space<vmem>>, vector<2x512xf32>,
    return
  }
}

</mosaic_0001>

<llo_original>
// kernel: linear_relu_pallas.1
$region0: #{linear_relu_pallas.1}
  #allocation0 [shape = 'u32[]', space=smem, size = 0x4, offset = 0x4, fixed_abs, tag = 'smem constant byte address 0x4 - core index']
  #allocation1 [shape = 'u32[144,128]{1,0:T(1,128)}', space=vmem, size = 0x12000, scoped, tag = 'internal scratch']
  %s0 = inlined_call_operand.hbm [shape: f32[2,1024], index: 0, kind: input, shape index: {}]
  %s1 = inlined_call_operand.hbm [shape: bf16[1024,512], index: 1, kind: input, shape index: {}]
  %s2 = inlined_call_operand.vmem [shape: f32[1,512], index: 2, kind: input, shape index: {}]
  %s3 = inlined_call_operand.hbm [shape: f32[2,512], index: 3, kind: output, shape index: {}]
  %s4 = sld [smem:[#allocation0]]
  $region30: #{linear_relu_pallas.1} parent=0
    _
  %s6 = ssub.s32 1, %s4
  %s7 = scalar_select 0, %s6, %s4
  $region1: #{linear_relu_pallas.1} parent=0
    #allocation2 [shape = 'u8[8192]{0}', space=vmem, size = 0x2000, scoped, tag = 'input window, operand 0, single buffered']
    #allocation3 [shape = 's32[1]{0}', space=sflag, size = 0x4, scoped, tag = 'scoped memory for linear_relu_pallas.1']
    #allocation4 [shape = 's32[1]{0}', space=sflag, size = 0x4, scoped, tag = 'scoped memory for linear_relu_pallas.1']
    #allocation5 [shape = 'u8[1048576]{0}', space=vmem, size = 0x100000, scoped, tag = 'input window, operand 1, single buffered']
    #allocation6 [shape = 's32[1]{0}', space=sflag, size = 0x4, scoped, tag = 'scoped memory for linear_relu_pallas.1']
    #allocation7 [shape = 'u8[4096]{0}', space=vmem, size = 0x1000, scoped, tag = 'output window, operand 0, single buffered']
    %8 = vsyncpa [#allocation3], 0
    %9 = vsyncpa [#allocation6], 0
    %10 = vsyncpa [#allocation4], 0
    // Predicated region
    $region2: #{linear_relu_pallas.1} parent=1 // pred_check
      _
    $region3: #{linear_relu_pallas.1} parent=1 // pred_check_branch
      %12 = sbr.rel (0) target = $region5
    $region4: #{linear_relu_pallas.1} parent=1 // pred_region
      %s14 = ssub.s32 256, 256
      %15 = vsyncadd [#allocation3], %s14
      %s17 = sshll.u32 [#allocation2], 4
      %s18 = int_to_ptr.vmem [resolvable:$true] %s17
      %20 = dma.hbm_to_vmem [thread:$0]  %s0, 256, %s18, [#allocation3]
    $region5: #{linear_relu_pallas.1} parent=1 // pred_fallthru
      _
    // Predicated region
    $region6: #{linear_relu_pallas.1} parent=1 // pred_check
      _
    $region7: #{linear_relu_pallas.1} parent=1 // pred_check_branch
      %22 = sbr.rel (0) target = $region9
    $region8: #{linear_relu_pallas.1} parent=1 // pred_region
      %s24 = ssub.s32 32768, 32768
      %25 = vsyncadd [#allocation6], %s24
      %s26 = sshll.u32 [#allocation5], 4
      %s27 = int_to_ptr.vmem [resolvable:$true] %s26
      %32 = dma.hbm_to_vmem [thread:$0]  %s1, 32768, %s27, [#allocation6], 256, 256, 16
    $region9: #{linear_relu_pallas.1} parent=1 // pred_fallthru
      _
    // Predicated region
    $region10: #{linear_relu_pallas.1} parent=1 // pred_check
      _
    $region11: #{linear_relu_pallas.1} parent=1 // pred_check_branch
      %34 = sbr.rel (0) target = $region13
    $region12: #{linear_relu_pallas.1} parent=1 // pred_region
      _
    $region13: #{linear_relu_pallas.1} parent=1 // pred_fallthru
      _
    // Predicated region
    $region14: #{linear_relu_pallas.1} parent=1 // pred_check
      _
    $region15: #{linear_relu_pallas.1} parent=1 // pred_check_branch
      %36 = sbr.rel (0) target = $region17
    $region16: #{linear_relu_pallas.1} parent=1 // pred_region
      %37 = dma.done [#allocation3], 256
    $region17: #{linear_relu_pallas.1} parent=1 // pred_fallthru
      _
    // Predicated region
    $region18: #{linear_relu_pallas.1} parent=1 // pred_check
      _
    $region19: #{linear_relu_pallas.1} parent=1 // pred_check_branch
      %39 = sbr.rel (0) target = $region21
    $region20: #{linear_relu_pallas.1} parent=1 // pred_region
      %40 = dma.done [#allocation6], 32768
    $region21: #{linear_relu_pallas.1} parent=1 // pred_fallthru
      _
    %v41 = vld [vmem:[#allocation2] sm:$0xff]
    %v42 = vld [vmem:[#allocation2 + $0x8] sm:$0xff]
    %v45 = vcombine.high %v41, %v41
    %v47 = vunpack.c.l.s4 1983009808
    %v48 = vunpack.c.0.s8 %v47
    %v49 = vlaneseq
    %v50 = vshrl.u32 %v49, 7
    %v51 = vsub.s32 %v48, %v50
    %v52 = vrot.slane %v41, %v51
    %v54 = vunpack.c.l.s4 1983009808
    %v55 = vunpack.c.0.s8 %v54
    %v56 = vlaneseq
    %v57 = vshrl.u32 %v56, 7
    %v58 = vsub.s32 %v55, %v57
    %v59 = vrot.slane %v45, %v58
    %v60 = vcombine.high %v52, %v52
    %v61 = vcombine.high %v59, %v59
    %v62 = vcombine.high %v42, %v42
    %v64 = vunpack.c.l.s4 1983009808
    %v65 = vunpack.c.0.s8 %v64
    %v66 = vlaneseq
    %v67 = vshrl.u32 %v66, 7
    %v68 = vsub.s32 %v65, %v67
    %v69 = vrot.slane %v42, %v68
    %v71 = vunpack.c.l.s4 1983009808
    %v72 = vunpack.c.0.s8 %v71
    %v73 = vlaneseq
    %v74 = vshrl.u32 %v73, 7
    %v75 = vsub.s32 %v72, %v74
    %v76 = vrot.slane %v62, %v75
    %v77 = vcombine.high %v69, %v69
    %v78 = vcombine.high %v76, %v76
    %v87 = vpack.c.bf16 %v52, %v52
    %v88 = vpack.c.bf16 %v60, %v60
    %v89 = vpack.c.bf16 %v59, %v59
    %v90 = vpack.c.bf16 %v61, %v61
    %v91 = vpack.c.bf16 %v69, %v69
    %v92 = vpack.c.bf16 %v77, %v77
    %v93 = vpack.c.bf16 %v76, %v76
    %v94 = vpack.c.bf16 %v78, %v78
    %v95 = vld [vmem:[#allocation5] sm:$0xff]
    %v96 = vld [vmem:[#allocation5 + $0x8] sm:$0xff]
    %v97 = vld [vmem:[#allocation5 + $0x10] sm:$0xff]
    %v98 = vld [vmem:[#allocation5 + $0x18] sm:$0xff]
    %v99 = vld [vmem:[#allocation5 + $0x20] sm:$0xff]
    %v100 = vld [vmem:[#allocation5 + $0x28] sm:$0xff]
    %v101 = vld [vmem:[#allocation5 + $0x30] sm:$0xff]
    %v102 = vld [vmem:[#allocation5 + $0x38] sm:$0xff]
    %v103 = vld [vmem:[#allocation5 + $0x40] sm:$0xff]
    %v104 = vld [vmem:[#allocation5 + $0x48] sm:$0xff]
    %v105 = vld [vmem:[#allocation5 + $0x50] sm:$0xff]
    %v106 = vld [vmem:[#allocation5 + $0x58] sm:$0xff]
    %v107 = vld [vmem:[#allocation5 + $0x60] sm:$0xff]
    %v108 = vld [vmem:[#allocation5 + $0x68] sm:$0xff]
    %v109 = vld [vmem:[#allocation5 + $0x70] sm:$0xff]
    %v110 = vld [vmem:[#allocation5 + $0x78] sm:$0xff]
    %v111 = vld [vmem:[#allocation5 + $0x80] sm:$0xff]
    %v112 = vld [vmem:[#allocation5 + $0x88] sm:$0xff]
    %v113 = vld [vmem:[#allocation5 + $0x90] sm:$0xff]
    %v114 = vld [vmem:[#allocation5 + $0x98] sm:$0xff]
    %v115 = vld [vmem:[#allocation5 + $0xa0] sm:$0xff]
    %v116 = vld [vmem:[#allocation5 + $0xa8] sm:$0xff]
    %v117 = vld [vmem:[#allocation5 + $0xb0] sm:$0xff]
    %v118 = vld [vmem:[#allocation5 + $0xb8] sm:$0xff]
    %v119 = vld [vmem:[#allocation5 + $0xc0] sm:$0xff]
    %v120 = vld [vmem:[#allocation5 + $0xc8] sm:$0xff]
    %v121 = vld [vmem:[#allocation5 + $0xd0] sm:$0xff]
    %v122 = vld [vmem:[#allocation5 + $0xd8] sm:$0xff]
    %v123 = vld [vmem:[#allocation5 + $0xe0] sm:$0xff]
    %v124 = vld [vmem:[#allocation5 + $0xe8] sm:$0xff]
    %v125 = vld [vmem:[#allocation5 + $0xf0] sm:$0xff]
    %v126 = vld [vmem:[#allocation5 + $0xf8] sm:$0xff]
    %v127 = vld [vmem:[#allocation5 + $0x100] sm:$0xff]
    %v128 = vld [vmem:[#allocation5 + $0x108] sm:$0xff]
    %v129 = vld [vmem:[#allocation5 + $0x110] sm:$0xff]
    %v130 = vld [vmem:[#allocation5 + $0x118] sm:$0xff]
    %v131 = vld [vmem:[#allocation5 + $0x120] sm:$0xff]
    %v132 = vld [vmem:[#allocation5 + $0x128] sm:$0xff]
    %v133 = vld [vmem:[#allocation5 + $0x130] sm:$0xff]
    %v134 = vld [vmem:[#allocation5 + $0x138] sm:$0xff]
    %v135 = vld [vmem:[#allocation5 + $0x140] sm:$0xff]
    %v136 = vld [vmem:[#allocation5 + $0x148] sm:$0xff]
    %v137 = vld [vmem:[#allocation5 + $0x150] sm:$0xff]
    %v138 = vld [vmem:[#allocation5 + $0x158] sm:$0xff]
    %v139 = vld [vmem:[#allocation5 + $0x160] sm:$0xff]
    %v140 = vld [vmem:[#allocation5 + $0x168] sm:$0xff]
    %v141 = vld [vmem:[#allocation5 + $0x170] sm:$0xff]
    %v142 = vld [vmem:[#allocation5 + $0x178] sm:$0xff]
    %v143 = vld [vmem:[#allocation5 + $0x180] sm:$0xff]
    %v144 = vld [vmem:[#allocation5 + $0x188] sm:$0xff]
    %v145 = vld [vmem:[#allocation5 + $0x190] sm:$0xff]
    %v146 = vld [vmem:[#allocation5 + $0x198] sm:$0xff]
    %v147 = vld [vmem:[#allocation5 + $0x1a0] sm:$0xff]
    %v148 = vld [vmem:[#allocation5 + $0x1a8] sm:$0xff]
    %v149 = vld [vmem:[#allocation5 + $0x1b0] sm:$0xff]
    %v150 = vld [vmem:[#allocation5 + $0x1b8] sm:$0xff]
    %v151 = vld [vmem:[#allocation5 + $0x1c0] sm:$0xff]
    %v152 = vld [vmem:[#allocation5 + $0x1c8] sm:$0xff]
    %v153 = vld [vmem:[#allocation5 + $0x1d0] sm:$0xff]
    %v154 = vld [vmem:[#allocation5 + $0x1d8] sm:$0xff]
    %v155 = vld [vmem:[#allocation5 + $0x1e0] sm:$0xff]
    %v156 = vld [vmem:[#allocation5 + $0x1e8] sm:$0xff]
    %v157 = vld [vmem:[#allocation5 + $0x1f0] sm:$0xff]
    %v158 = vld [vmem:[#allocation5 + $0x1f8] sm:$0xff]
    %v159 = vld [vmem:[#allocation5 + $0x200] sm:$0xff]
    %v160 = vld [vmem:[#allocation5 + $0x208] sm:$0xff]
    %v161 = vld [vmem:[#allocation5 + $0x210] sm:$0xff]
    %v162 = vld [vmem:[#allocation5 + $0x218] sm:$0xff]
    %v163 = vld [vmem:[#allocation5 + $0x220] sm:$0xff]
    %v164 = vld [vmem:[#allocation5 + $0x228] sm:$0xff]
    %v165 = vld [vmem:[#allocation5 + $0x230] sm:$0xff]
    %v166 = vld [vmem:[#allocation5 + $0x238] sm:$0xff]
    %v167 = vld [vmem:[#allocation5 + $0x240] sm:$0xff]
    %v168 = vld [vmem:[#allocation5 + $0x248] sm:$0xff]
    %v169 = vld [vmem:[#allocation5 + $0x250] sm:$0xff]
    %v170 = vld [vmem:[#allocation5 + $0x258] sm:$0xff]
    %v171 = vld [vmem:[#allocation5 + $0x260] sm:$0xff]
    %v172 = vld [vmem:[#allocation5 + $0x268] sm:$0xff]
    %v173 = vld [vmem:[#allocation5 + $0x270] sm:$0xff]
    %v174 = vld [vmem:[#allocation5 + $0x278] sm:$0xff]
    %v175 = vld [vmem:[#allocation5 + $0x280] sm:$0xff]
    %v176 = vld [vmem:[#allocation5 + $0x288] sm:$0xff]
    %v177 = vld [vmem:[#allocation5 + $0x290] sm:$0xff]
    %v178 = vld [vmem:[#allocation5 + $0x298] sm:$0xff]
    %v179 = vld [vmem:[#allocation5 + $0x2a0] sm:$0xff]
    %v180 = vld [vmem:[#allocation5 + $0x2a8] sm:$0xff]
    %v181 = vld [vmem:[#allocation5 + $0x2b0] sm:$0xff]
    %v182 = vld [vmem:[#allocation5 + $0x2b8] sm:$0xff]
    %v183 = vld [vmem:[#allocation5 + $0x2c0] sm:$0xff]
    %v184 = vld [vmem:[#allocation5 + $0x2c8] sm:$0xff]
    %v185 = vld [vmem:[#allocation5 + $0x2d0] sm:$0xff]
    %v186 = vld [vmem:[#allocation5 + $0x2d8] sm:$0xff]
    %v187 = vld [vmem:[#allocation5 + $0x2e0] sm:$0xff]
    %v188 = vld [vmem:[#allocation5 + $0x2e8] sm:$0xff]
    %v189 = vld [vmem:[#allocation5 + $0x2f0] sm:$0xff]
    %v190 = vld [vmem:[#allocation5 + $0x2f8] sm:$0xff]
    %v191 = vld [vmem:[#allocation5 + $0x300] sm:$0xff]
    %v192 = vld [vmem:[#allocation5 + $0x308] sm:$0xff]
    %v193 = vld [vmem:[#allocation5 + $0x310] sm:$0xff]
    %v194 = vld [vmem:[#allocation5 + $0x318] sm:$0xff]
    %v195 = vld [vmem:[#allocation5 + $0x320] sm:$0xff]
    %v196 = vld [vmem:[#allocation5 + $0x328] sm:$0xff]
    %v197 = vld [vmem:[#allocation5 + $0x330] sm:$0xff]
    %v198 = vld [vmem:[#allocation5 + $0x338] sm:$0xff]
    %v199 = vld [vmem:[#allocation5 + $0x340] sm:$0xff]
    %v200 = vld [vmem:[#allocation5 + $0x348] sm:$0xff]
    %v201 = vld [vmem:[#allocation5 + $0x350] sm:$0xff]
    %v202 = vld [vmem:[#allocation5 + $0x358] sm:$0xff]
    %v203 = vld [vmem:[#allocation5 + $0x360] sm:$0xff]
    %v204 = vld [vmem:[#allocation5 + $0x368] sm:$0xff]
    %v205 = vld [vmem:[#allocation5 + $0x370] sm:$0xff]
    %v206 = vld [vmem:[#allocation5 + $0x378] sm:$0xff]
    %v207 = vld [vmem:[#allocation5 + $0x380] sm:$0xff]
    %v208 = vld [vmem:[#allocation5 + $0x388] sm:$0xff]
    %v209 = vld [vmem:[#allocation5 + $0x390] sm:$0xff]
    %v210 = vld [vmem:[#allocation5 + $0x398] sm:$0xff]
    %v211 = vld [vmem:[#allocation5 + $0x3a0] sm:$0xff]
    %v212 = vld [vmem:[#allocation5 + $0x3a8] sm:$0xff]
    %v213 = vld [vmem:[#allocation5 + $0x3b0] sm:$0xff]
    %v214 = vld [vmem:[#allocation5 + $0x3b8] sm:$0xff]
    %v215 = vld [vmem:[#allocation5 + $0x3c0] sm:$0xff]
    %v216 = vld [vmem:[#allocation5 + $0x3c8] sm:$0xff]
    %v217 = vld [vmem:[#allocation5 + $0x3d0] sm:$0xff]
    %v218 = vld [vmem:[#allocation5 + $0x3d8] sm:$0xff]
    %v219 = vld [vmem:[#allocation5 + $0x3e0] sm:$0xff]
    %v220 = vld [vmem:[#allocation5 + $0x3e8] sm:$0xff]
    %v221 = vld [vmem:[#allocation5 + $0x3f0] sm:$0xff]
    %v222 = vld [vmem:[#allocation5 + $0x3f8] sm:$0xff]
    %v223 = vld [vmem:[#allocation5 + $0x400] sm:$0xff]
    %v224 = vld [vmem:[#allocation5 + $0x408] sm:$0xff]
    %v225 = vld [vmem:[#allocation5 + $0x410] sm:$0xff]
    %v226 = vld [vmem:[#allocation5 + $0x418] sm:$0xff]
    %v227 = vld [vmem:[#allocation5 + $0x420] sm:$0xff]
    %v228 = vld [vmem:[#allocation5 + $0x428] sm:$0xff]
    %v229 = vld [vmem:[#allocation5 + $0x430] sm:$0xff]
    %v230 = vld [vmem:[#allocation5 + $0x438] sm:$0xff]
    %v231 = vld [vmem:[#allocation5 + $0x440] sm:$0xff]
    %v232 = vld [vmem:[#allocation5 + $0x448] sm:$0xff]
    %v233 = vld [vmem:[#allocation5 + $0x450] sm:$0xff]
    %v234 = vld [vmem:[#allocation5 + $0x458] sm:$0xff]
    %v235 = vld [vmem:[#allocation5 + $0x460] sm:$0xff]
    %v236 = vld [vmem:[#allocation5 + $0x468] sm:$0xff]
    %v237 = vld [vmem:[#allocation5 + $0x470] sm:$0xff]
    %v238 = vld [vmem:[#allocation5 + $0x478] sm:$0xff]
    %v239 = vld [vmem:[#allocation5 + $0x480] sm:$0xff]
    %v240 = vld [vmem:[#allocation5 + $0x488] sm:$0xff]
    %v241 = vld [vmem:[#allocation5 + $0x490] sm:$0xff]
    %v242 = vld [vmem:[#allocation5 + $0x498] sm:$0xff]
    %v243 = vld [vmem:[#allocation5 + $0x4a0] sm:$0xff]
    %v244 = vld [vmem:[#allocation5 + $0x4a8] sm:$0xff]
    %v245 = vld [vmem:[#allocation5 + $0x4b0] sm:$0xff]
    %v246 = vld [vmem:[#allocation5 + $0x4b8] sm:$0xff]
    %v247 = vld [vmem:[#allocation5 + $0x4c0] sm:$0xff]
    %v248 = vld [vmem:[#allocation5 + $0x4c8] sm:$0xff]
    %v249 = vld [vmem:[#allocation5 + $0x4d0] sm:$0xff]
    %v250 = vld [vmem:[#allocation5 + $0x4d8] sm:$0xff]
    %v251 = vld [vmem:[#allocation5 + $0x4e0] sm:$0xff]
    %v252 = vld [vmem:[#allocation5 + $0x4e8] sm:$0xff]
    %v253 = vld [vmem:[#allocation5 + $0x4f0] sm:$0xff]
    %v254 = vld [vmem:[#allocation5 + $0x4f8] sm:$0xff]
    %v255 = vld [vmem:[#allocation5 + $0x500] sm:$0xff]
    %v256 = vld [vmem:[#allocation5 + $0x508] sm:$0xff]
    %v257 = vld [vmem:[#allocation5 + $0x510] sm:$0xff]
    %v258 = vld [vmem:[#allocation5 + $0x518] sm:$0xff]
    %v259 = vld [vmem:[#allocation5 + $0x520] sm:$0xff]
    %v260 = vld [vmem:[#allocation5 + $0x528] sm:$0xff]
    %v261 = vld [vmem:[#allocation5 + $0x530] sm:$0xff]
    %v262 = vld [vmem:[#allocation5 + $0x538] sm:$0xff]
    %v263 = vld [vmem:[#allocation5 + $0x540] sm:$0xff]
    %v264 = vld [vmem:[#allocation5 + $0x548] sm:$0xff]
    %v265 = vld [vmem:[#allocation5 + $0x550] sm:$0xff]
    %v266 = vld [vmem:[#allocation5 + $0x558] sm:$0xff]
    %v267 = vld [vmem:[#allocation5 + $0x560] sm:$0xff]
    %v268 = vld [vmem:[#allocation5 + $0x568] sm:$0xff]
    %v269 = vld [vmem:[#allocation5 + $0x570] sm:$0xff]
    %v270 = vld [vmem:[#allocation5 + $0x578] sm:$0xff]
    %v271 = vld [vmem:[#allocation5 + $0x580] sm:$0xff]
    %v272 = vld [vmem:[#allocation5 + $0x588] sm:$0xff]
    %v273 = vld [vmem:[#allocation5 + $0x590] sm:$0xff]
    %v274 = vld [vmem:[#allocation5 + $0x598] sm:$0xff]
    %v275 = vld [vmem:[#allocation5 + $0x5a0] sm:$0xff]
    %v276 = vld [vmem:[#allocation5 + $0x5a8] sm:$0xff]
    %v277 = vld [vmem:[#allocation5 + $0x5b0] sm:$0xff]
    %v278 = vld [vmem:[#allocation5 + $0x5b8] sm:$0xff]
    %v279 = vld [vmem:[#allocation5 + $0x5c0] sm:$0xff]
    %v280 = vld [vmem:[#allocation5 + $0x5c8] sm:$0xff]
    %v281 = vld [vmem:[#allocation5 + $0x5d0] sm:$0xff]
    %v282 = vld [vmem:[#allocation5 + $0x5d8] sm:$0xff]
    %v283 = vld [vmem:[#allocation5 + $0x5e0] sm:$0xff]
    %v284 = vld [vmem:[#allocation5 + $0x5e8] sm:$0xff]
    %v285 = vld [vmem:[#allocation5 + $0x5f0] sm:$0xff]
    %v286 = vld [vmem:[#allocation5 + $0x5f8] sm:$0xff]
    %v287 = vld [vmem:[#allocation5 + $0x600] sm:$0xff]
    %v288 = vld [vmem:[#allocation5 + $0x608] sm:$0xff]
    %v289 = vld [vmem:[#allocation5 + $0x610] sm:$0xff]
    %v290 = vld [vmem:[#allocation5 + $0x618] sm:$0xff]
    %v291 = vld [vmem:[#allocation5 + $0x620] sm:$0xff]
    %v292 = vld [vmem:[#allocation5 + $0x628] sm:$0xff]
    %v293 = vld [vmem:[#allocation5 + $0x630] sm:$0xff]
    %v294 = vld [vmem:[#allocation5 + $0x638] sm:$0xff]
    %v295 = vld [vmem:[#allocation5 + $0x640] sm:$0xff]
    %v296 = vld [vmem:[#allocation5 + $0x648] sm:$0xff]
    %v297 = vld [vmem:[#allocation5 + $0x650] sm:$0xff]
    %v298 = vld [vmem:[#allocation5 + $0x658] sm:$0xff]
    %v299 = vld [vmem:[#allocation5 + $0x660] sm:$0xff]
    %v300 = vld [vmem:[#allocation5 + $0x668] sm:$0xff]
    %v301 = vld [vmem:[#allocation5 + $0x670] sm:$0xff]
    %v302 = vld [vmem:[#allocation5 + $0x678] sm:$0xff]
    %v303 = vld [vmem:[#allocation5 + $0x680] sm:$0xff]
    %v304 = vld [vmem:[#allocation5 + $0x688] sm:$0xff]
    %v305 = vld [vmem:[#allocation5 + $0x690] sm:$0xff]
    %v306 = vld [vmem:[#allocation5 + $0x698] sm:$0xff]
    %v307 = vld [vmem:[#allocation5 + $0x6a0] sm:$0xff]
    %v308 = vld [vmem:[#allocation5 + $0x6a8] sm:$0xff]
    %v309 = vld [vmem:[#allocation5 + $0x6b0] sm:$0xff]
    %v310 = vld [vmem:[#allocation5 + $0x6b8] sm:$0xff]
    %v311 = vld [vmem:[#allocation5 + $0x6c0] sm:$0xff]
    %v312 = vld [vmem:[#allocation5 + $0x6c8] sm:$0xff]
    %v313 = vld [vmem:[#allocation5 + $0x6d0] sm:$0xff]
    %v314 = vld [vmem:[#allocation5 + $0x6d8] sm:$0xff]
    %v315 = vld [vmem:[#allocation5 + $0x6e0] sm:$0xff]
    %v316 = vld [vmem:[#allocation5 + $0x6e8] sm:$0xff]
    %v317 = vld [vmem:[#allocation5 + $0x6f0] sm:$0xff]
    %v318 = vld [vmem:[#allocation5 + $0x6f8] sm:$0xff]
    %v319 = vld [vmem:[#allocation5 + $0x700] sm:$0xff]
    %v320 = vld [vmem:[#allocation5 + $0x708] sm:$0xff]
    %v321 = vld [vmem:[#allocation5 + $0x710] sm:$0xff]
    %v322 = vld [vmem:[#allocation5 + $0x718] sm:$0xff]
    %v323 = vld [vmem:[#allocation5 + $0x720] sm:$0xff]
    %v324 = vld [vmem:[#allocation5 + $0x728] sm:$0xff]
    %v325 = vld [vmem:[#allocation5 + $0x730] sm:$0xff]
    %v326 = vld [vmem:[#allocation5 + $0x738] sm:$0xff]
    %v327 = vld [vmem:[#allocation5 + $0x740] sm:$0xff]
    %v328 = vld [vmem:[#allocation5 + $0x748] sm:$0xff]
    %v329 = vld [vmem:[#allocation5 + $0x750] sm:$0xff]
    %v330 = vld [vmem:[#allocation5 + $0x758] sm:$0xff]
    %v331 = vld [vmem:[#allocation5 + $0x760] sm:$0xff]
    %v332 = vld [vmem:[#allocation5 + $0x768] sm:$0xff]
    %v333 = vld [vmem:[#allocation5 + $0x770] sm:$0xff]
    %v334 = vld [vmem:[#allocation5 + $0x778] sm:$0xff]
    %v335 = vld [vmem:[#allocation5 + $0x780] sm:$0xff]
    %v336 = vld [vmem:[#allocation5 + $0x788] sm:$0xff]
    %v337 = vld [vmem:[#allocation5 + $0x790] sm:$0xff]
    %v338 = vld [vmem:[#allocation5 + $0x798] sm:$0xff]
    %v339 = vld [vmem:[#allocation5 + $0x7a0] sm:$0xff]
    %v340 = vld [vmem:[#allocation5 + $0x7a8] sm:$0xff]
    %v341 = vld [vmem:[#allocation5 + $0x7b0] sm:$0xff]
    %v342 = vld [vmem:[#allocation5 + $0x7b8] sm:$0xff]
    %v343 = vld [vmem:[#allocation5 + $0x7c0] sm:$0xff]
    %v344 = vld [vmem:[#allocation5 + $0x7c8] sm:$0xff]
    %v345 = vld [vmem:[#allocation5 + $0x7d0] sm:$0xff]
    %v346 = vld [vmem:[#allocation5 + $0x7d8] sm:$0xff]
    %v347 = vld [vmem:[#allocation5 + $0x7e0] sm:$0xff]
    %v348 = vld [vmem:[#allocation5 + $0x7e8] sm:$0xff]
    %v349 = vld [vmem:[#allocation5 + $0x7f0] sm:$0xff]
    %v350 = vld [vmem:[#allocation5 + $0x7f8] sm:$0xff]
    %v351 = vld [vmem:[%s2] sm:$0xf]
    %v353 = vlaneseq
    %v354 = vshrl.u32 %v353, 7
    %v355 = vsub.s32 0, %v354
    %v356 = vrot.slane %v351, %v355
    %v357 = vlaneseq
    %v358 = vshrl.u32 %v357, 7
    %v359 = vsub.s32 1, %v358
    %v360 = vrot.slane %v351, %v359
    %v361 = vlaneseq
    %v362 = vshrl.u32 %v361, 7
    %v363 = vsub.s32 2, %v362
    %v364 = vrot.slane %v351, %v363
    %v365 = vlaneseq
    %v366 = vshrl.u32 %v365, 7
    %v367 = vsub.s32 3, %v366
    %v368 = vrot.slane %v351, %v367
    %v629 = vunpack.c.l.b16 %v95
    %v630 = vunpack.c.h.b16 %v95
    %v631 = vunpack.c.l.b16 %v96
    %v632 = vunpack.c.h.b16 %v96
    %v633 = vunpack.c.l.b16 %v97
    %v634 = vunpack.c.h.b16 %v97
    %v635 = vunpack.c.l.b16 %v98
    %v636 = vunpack.c.h.b16 %v98
    %v637 = vunpack.c.l.b16 %v99
    %v638 = vunpack.c.h.b16 %v99
    %v639 = vunpack.c.l.b16 %v100
    %v640 = vunpack.c.h.b16 %v100
    %v641 = vunpack.c.l.b16 %v101
    %v642 = vunpack.c.h.b16 %v101
    %v643 = vunpack.c.l.b16 %v102
    %v644 = vunpack.c.h.b16 %v102
    %v645 = vunpack.c.l.b16 %v103
    %v646 = vunpack.c.h.b16 %v103
    %v647 = vunpack.c.l.b16 %v104
    %v648 = vunpack.c.h.b16 %v104
    %v649 = vunpack.c.l.b16 %v105
    %v650 = vunpack.c.h.b16 %v105
    %v651 = vunpack.c.l.b16 %v106
    %v652 = vunpack.c.h.b16 %v106
    %v653 = vunpack.c.l.b16 %v107
    %v654 = vunpack.c.h.b16 %v107
    %v655 = vunpack.c.l.b16 %v108
    %v656 = vunpack.c.h.b16 %v108
    %v657 = vunpack.c.l.b16 %v109
    %v658 = vunpack.c.h.b16 %v109
    %v659 = vunpack.c.l.b16 %v110
    %v660 = vunpack.c.h.b16 %v110
    %v661 = vunpack.c.l.b16 %v111
    %v662 = vunpack.c.h.b16 %v111
    %v663 = vunpack.c.l.b16 %v112
    %v664 = vunpack.c.h.b16 %v112
    %v665 = vunpack.c.l.b16 %v113
    %v666 = vunpack.c.h.b16 %v113
    %v667 = vunpack.c.l.b16 %v114
    %v668 = vunpack.c.h.b16 %v114
    %v669 = vunpack.c.l.b16 %v115
    %v670 = vunpack.c.h.b16 %v115
    %v671 = vunpack.c.l.b16 %v116
    %v672 = vunpack.c.h.b16 %v116
    %v673 = vunpack.c.l.b16 %v117
    %v674 = vunpack.c.h.b16 %v117
    %v675 = vunpack.c.l.b16 %v118
    %v676 = vunpack.c.h.b16 %v118
    %v677 = vunpack.c.l.b16 %v119
    %v678 = vunpack.c.h.b16 %v119
    %v679 = vunpack.c.l.b16 %v120
    %v680 = vunpack.c.h.b16 %v120
    %v681 = vunpack.c.l.b16 %v121
    %v682 = vunpack.c.h.b16 %v121
    %v683 = vunpack.c.l.b16 %v122
    %v684 = vunpack.c.h.b16 %v122
    %v685 = vunpack.c.l.b16 %v123
    %v686 = vunpack.c.h.b16 %v123
    %v687 = vunpack.c.l.b16 %v124
    %v688 = vunpack.c.h.b16 %v124
    %v689 = vunpack.c.l.b16 %v125
    %v690 = vunpack.c.h.b16 %v125
    %v691 = vunpack.c.l.b16 %v126
    %v692 = vunpack.c.h.b16 %v126
    %v693 = vunpack.c.l.b16 %v127
    %v694 = vunpack.c.h.b16 %v127
    %v695 = vunpack.c.l.b16 %v128
    %v696 = vunpack.c.h.b16 %v128
    %v697 = vunpack.c.l.b16 %v129
    %v698 = vunpack.c.h.b16 %v129
    %v699 = vunpack.c.l.b16 %v130
    %v700 = vunpack.c.h.b16 %v130
    %v701 = vunpack.c.l.b16 %v131
    %v702 = vunpack.c.h.b16 %v131
    %v703 = vunpack.c.l.b16 %v132
    %v704 = vunpack.c.h.b16 %v132
    %v705 = vunpack.c.l.b16 %v133
    %v706 = vunpack.c.h.b16 %v133
    %v707 = vunpack.c.l.b16 %v134
    %v708 = vunpack.c.h.b16 %v134
    %v709 = vunpack.c.l.b16 %v135
    %v710 = vunpack.c.h.b16 %v135
    %v711 = vunpack.c.l.b16 %v136
    %v712 = vunpack.c.h.b16 %v136
    %v713 = vunpack.c.l.b16 %v137
    %v714 = vunpack.c.h.b16 %v137
    %v715 = vunpack.c.l.b16 %v138
    %v716 = vunpack.c.h.b16 %v138
    %v717 = vunpack.c.l.b16 %v139
    %v718 = vunpack.c.h.b16 %v139
    %v719 = vunpack.c.l.b16 %v140
    %v720 = vunpack.c.h.b16 %v140
    %v721 = vunpack.c.l.b16 %v141
    %v722 = vunpack.c.h.b16 %v141
    %v723 = vunpack.c.l.b16 %v142
    %v724 = vunpack.c.h.b16 %v142
    %v725 = vunpack.c.l.b16 %v143
    %v726 = vunpack.c.h.b16 %v143
    %v727 = vunpack.c.l.b16 %v144
    %v728 = vunpack.c.h.b16 %v144
    %v729 = vunpack.c.l.b16 %v145
    %v730 = vunpack.c.h.b16 %v145
    %v731 = vunpack.c.l.b16 %v146
    %v732 = vunpack.c.h.b16 %v146
    %v733 = vunpack.c.l.b16 %v147
    %v734 = vunpack.c.h.b16 %v147
    %v735 = vunpack.c.l.b16 %v148
    %v736 = vunpack.c.h.b16 %v148
    %v737 = vunpack.c.l.b16 %v149
    %v738 = vunpack.c.h.b16 %v149
    %v739 = vunpack.c.l.b16 %v150
    %v740 = vunpack.c.h.b16 %v150
    %v741 = vunpack.c.l.b16 %v151
    %v742 = vunpack.c.h.b16 %v151
    %v743 = vunpack.c.l.b16 %v152
    %v744 = vunpack.c.h.b16 %v152
    %v745 = vunpack.c.l.b16 %v153
    %v746 = vunpack.c.h.b16 %v153
    %v747 = vunpack.c.l.b16 %v154
    %v748 = vunpack.c.h.b16 %v154
    %v749 = vunpack.c.l.b16 %v155
    %v750 = vunpack.c.h.b16 %v155
    %v751 = vunpack.c.l.b16 %v156
    %v752 = vunpack.c.h.b16 %v156
    %v753 = vunpack.c.l.b16 %v157
    %v754 = vunpack.c.h.b16 %v157
    %v755 = vunpack.c.l.b16 %v158
    %v756 = vunpack.c.h.b16 %v158
    %v757 = vunpack.c.l.b16 %v159
    %v758 = vunpack.c.h.b16 %v159
    %v759 = vunpack.c.l.b16 %v160
    %v760 = vunpack.c.h.b16 %v160
    %v761 = vunpack.c.l.b16 %v161
    %v762 = vunpack.c.h.b16 %v161
    %v763 = vunpack.c.l.b16 %v162
    %v764 = vunpack.c.h.b16 %v162
    %v765 = vunpack.c.l.b16 %v163
    %v766 = vunpack.c.h.b16 %v163
    %v767 = vunpack.c.l.b16 %v164
    %v768 = vunpack.c.h.b16 %v164
    %v769 = vunpack.c.l.b16 %v165
    %v770 = vunpack.c.h.b16 %v165
    %v771 = vunpack.c.l.b16 %v166
    %v772 = vunpack.c.h.b16 %v166
    %v773 = vunpack.c.l.b16 %v167
    %v774 = vunpack.c.h.b16 %v167
    %v775 = vunpack.c.l.b16 %v168
    %v776 = vunpack.c.h.b16 %v168
    %v777 = vunpack.c.l.b16 %v169
    %v778 = vunpack.c.h.b16 %v169
    %v779 = vunpack.c.l.b16 %v170
    %v780 = vunpack.c.h.b16 %v170
    %v781 = vunpack.c.l.b16 %v171
    %v782 = vunpack.c.h.b16 %v171
    %v783 = vunpack.c.l.b16 %v172
    %v784 = vunpack.c.h.b16 %v172
    %v785 = vunpack.c.l.b16 %v173
    %v786 = vunpack.c.h.b16 %v173
    %v787 = vunpack.c.l.b16 %v174
    %v788 = vunpack.c.h.b16 %v174
    %v789 = vunpack.c.l.b16 %v175
    %v790 = vunpack.c.h.b16 %v175
    %v791 = vunpack.c.l.b16 %v176
    %v792 = vunpack.c.h.b16 %v176
    %v793 = vunpack.c.l.b16 %v177
    %v794 = vunpack.c.h.b16 %v177
    %v795 = vunpack.c.l.b16 %v178
    %v796 = vunpack.c.h.b16 %v178
    %v797 = vunpack.c.l.b16 %v179
    %v798 = vunpack.c.h.b16 %v179
    %v799 = vunpack.c.l.b16 %v180
    %v800 = vunpack.c.h.b16 %v180
    %v801 = vunpack.c.l.b16 %v181
    %v802 = vunpack.c.h.b16 %v181
    %v803 = vunpack.c.l.b16 %v182
    %v804 = vunpack.c.h.b16 %v182
    %v805 = vunpack.c.l.b16 %v183
    %v806 = vunpack.c.h.b16 %v183
    %v807 = vunpack.c.l.b16 %v184
    %v808 = vunpack.c.h.b16 %v184
    %v809 = vunpack.c.l.b16 %v185
    %v810 = vunpack.c.h.b16 %v185
    %v811 = vunpack.c.l.b16 %v186
    %v812 = vunpack.c.h.b16 %v186
    %v813 = vunpack.c.l.b16 %v187
    %v814 = vunpack.c.h.b16 %v187
    %v815 = vunpack.c.l.b16 %v188
    %v816 = vunpack.c.h.b16 %v188
    %v817 = vunpack.c.l.b16 %v189
    %v818 = vunpack.c.h.b16 %v189
    %v819 = vunpack.c.l.b16 %v190
    %v820 = vunpack.c.h.b16 %v190
    %v821 = vunpack.c.l.b16 %v191
    %v822 = vunpack.c.h.b16 %v191
    %v823 = vunpack.c.l.b16 %v192
    %v824 = vunpack.c.h.b16 %v192
    %v825 = vunpack.c.l.b16 %v193
    %v826 = vunpack.c.h.b16 %v193
    %v827 = vunpack.c.l.b16 %v194
    %v828 = vunpack.c.h.b16 %v194
    %v829 = vunpack.c.l.b16 %v195
    %v830 = vunpack.c.h.b16 %v195
    %v831 = vunpack.c.l.b16 %v196
    %v832 = vunpack.c.h.b16 %v196
    %v833 = vunpack.c.l.b16 %v197
    %v834 = vunpack.c.h.b16 %v197
    %v835 = vunpack.c.l.b16 %v198
    %v836 = vunpack.c.h.b16 %v198
    %v837 = vunpack.c.l.b16 %v199
    %v838 = vunpack.c.h.b16 %v199
    %v839 = vunpack.c.l.b16 %v200
    %v840 = vunpack.c.h.b16 %v200
    %v841 = vunpack.c.l.b16 %v201
    %v842 = vunpack.c.h.b16 %v201
    %v843 = vunpack.c.l.b16 %v202
    %v844 = vunpack.c.h.b16 %v202
    %v845 = vunpack.c.l.b16 %v203
    %v846 = vunpack.c.h.b16 %v203
    %v847 = vunpack.c.l.b16 %v204
    %v848 = vunpack.c.h.b16 %v204
    %v849 = vunpack.c.l.b16 %v205
    %v850 = vunpack.c.h.b16 %v205
    %v851 = vunpack.c.l.b16 %v206
    %v852 = vunpack.c.h.b16 %v206
    %v853 = vunpack.c.l.b16 %v207
    %v854 = vunpack.c.h.b16 %v207
    %v855 = vunpack.c.l.b16 %v208
    %v856 = vunpack.c.h.b16 %v208
    %v857 = vunpack.c.l.b16 %v209
    %v858 = vunpack.c.h.b16 %v209
    %v859 = vunpack.c.l.b16 %v210
    %v860 = vunpack.c.h.b16 %v210
    %v861 = vunpack.c.l.b16 %v211
    %v862 = vunpack.c.h.b16 %v211
    %v863 = vunpack.c.l.b16 %v212
    %v864 = vunpack.c.h.b16 %v212
    %v865 = vunpack.c.l.b16 %v213
    %v866 = vunpack.c.h.b16 %v213
    %v867 = vunpack.c.l.b16 %v214
    %v868 = vunpack.c.h.b16 %v214
    %v869 = vunpack.c.l.b16 %v215
    %v870 = vunpack.c.h.b16 %v215
    %v871 = vunpack.c.l.b16 %v216
    %v872 = vunpack.c.h.b16 %v216
    %v873 = vunpack.c.l.b16 %v217
    %v874 = vunpack.c.h.b16 %v217
    %v875 = vunpack.c.l.b16 %v218
    %v876 = vunpack.c.h.b16 %v218
    %v877 = vunpack.c.l.b16 %v219
    %v878 = vunpack.c.h.b16 %v219
    %v879 = vunpack.c.l.b16 %v220
    %v880 = vunpack.c.h.b16 %v220
    %v881 = vunpack.c.l.b16 %v221
    %v882 = vunpack.c.h.b16 %v221
    %v883 = vunpack.c.l.b16 %v222
    %v884 = vunpack.c.h.b16 %v222
    %v885 = vunpack.c.l.b16 %v223
    %v886 = vunpack.c.h.b16 %v223
    %v887 = vunpack.c.l.b16 %v224
    %v888 = vunpack.c.h.b16 %v224
    %v889 = vunpack.c.l.b16 %v225
    %v890 = vunpack.c.h.b16 %v225
    %v891 = vunpack.c.l.b16 %v226
    %v892 = vunpack.c.h.b16 %v226
    %v893 = vunpack.c.l.b16 %v227
    %v894 = vunpack.c.h.b16 %v227
    %v895 = vunpack.c.l.b16 %v228
    %v896 = vunpack.c.h.b16 %v228
    %v897 = vunpack.c.l.b16 %v229
    %v898 = vunpack.c.h.b16 %v229
    %v899 = vunpack.c.l.b16 %v230
    %v900 = vunpack.c.h.b16 %v230
    %v901 = vunpack.c.l.b16 %v231
    %v902 = vunpack.c.h.b16 %v231
    %v903 = vunpack.c.l.b16 %v232
    %v904 = vunpack.c.h.b16 %v232
    %v905 = vunpack.c.l.b16 %v233
    %v906 = vunpack.c.h.b16 %v233
    %v907 = vunpack.c.l.b16 %v234
    %v908 = vunpack.c.h.b16 %v234
    %v909 = vunpack.c.l.b16 %v235
    %v910 = vunpack.c.h.b16 %v235
    %v911 = vunpack.c.l.b16 %v236
    %v912 = vunpack.c.h.b16 %v236
    %v913 = vunpack.c.l.b16 %v237
    %v914 = vunpack.c.h.b16 %v237
    %v915 = vunpack.c.l.b16 %v238
    %v916 = vunpack.c.h.b16 %v238
    %v917 = vunpack.c.l.b16 %v239
    %v918 = vunpack.c.h.b16 %v239
    %v919 = vunpack.c.l.b16 %v240
    %v920 = vunpack.c.h.b16 %v240
    %v921 = vunpack.c.l.b16 %v241
    %v922 = vunpack.c.h.b16 %v241
    %v923 = vunpack.c.l.b16 %v242
    %v924 = vunpack.c.h.b16 %v242
    %v925 = vunpack.c.l.b16 %v243
    %v926 = vunpack.c.h.b16 %v243
    %v927 = vunpack.c.l.b16 %v244
    %v928 = vunpack.c.h.b16 %v244
    %v929 = vunpack.c.l.b16 %v245
    %v930 = vunpack.c.h.b16 %v245
    %v931 = vunpack.c.l.b16 %v246
    %v932 = vunpack.c.h.b16 %v246
    %v933 = vunpack.c.l.b16 %v247
    %v934 = vunpack.c.h.b16 %v247
    %v935 = vunpack.c.l.b16 %v248
    %v936 = vunpack.c.h.b16 %v248
    %v937 = vunpack.c.l.b16 %v249
    %v938 = vunpack.c.h.b16 %v249
    %v939 = vunpack.c.l.b16 %v250
    %v940 = vunpack.c.h.b16 %v250
    %v941 = vunpack.c.l.b16 %v251
    %v942 = vunpack.c.h.b16 %v251
    %v943 = vunpack.c.l.b16 %v252
    %v944 = vunpack.c.h.b16 %v252
    %v945 = vunpack.c.l.b16 %v253
    %v946 = vunpack.c.h.b16 %v253
    %v947 = vunpack.c.l.b16 %v254
    %v948 = vunpack.c.h.b16 %v254
    %v949 = vunpack.c.l.b16 %v255
    %v950 = vunpack.c.h.b16 %v255
    %v951 = vunpack.c.l.b16 %v256
    %v952 = vunpack.c.h.b16 %v256
    %v953 = vunpack.c.l.b16 %v257
    %v954 = vunpack.c.h.b16 %v257
    %v955 = vunpack.c.l.b16 %v258
    %v956 = vunpack.c.h.b16 %v258
    %v957 = vunpack.c.l.b16 %v259
    %v958 = vunpack.c.h.b16 %v259
    %v959 = vunpack.c.l.b16 %v260
    %v960 = vunpack.c.h.b16 %v260
    %v961 = vunpack.c.l.b16 %v261
    %v962 = vunpack.c.h.b16 %v261
    %v963 = vunpack.c.l.b16 %v262
    %v964 = vunpack.c.h.b16 %v262
    %v965 = vunpack.c.l.b16 %v263
    %v966 = vunpack.c.h.b16 %v263
    %v967 = vunpack.c.l.b16 %v264
    %v968 = vunpack.c.h.b16 %v264
    %v969 = vunpack.c.l.b16 %v265
    %v970 = vunpack.c.h.b16 %v265
    %v971 = vunpack.c.l.b16 %v266
    %v972 = vunpack.c.h.b16 %v266
    %v973 = vunpack.c.l.b16 %v267
    %v974 = vunpack.c.h.b16 %v267
    %v975 = vunpack.c.l.b16 %v268
    %v976 = vunpack.c.h.b16 %v268
    %v977 = vunpack.c.l.b16 %v269
    %v978 = vunpack.c.h.b16 %v269
    %v979 = vunpack.c.l.b16 %v270
    %v980 = vunpack.c.h.b16 %v270
    %v981 = vunpack.c.l.b16 %v271
    %v982 = vunpack.c.h.b16 %v271
    %v983 = vunpack.c.l.b16 %v272
    %v984 = vunpack.c.h.b16 %v272
    %v985 = vunpack.c.l.b16 %v273
    %v986 = vunpack.c.h.b16 %v273
    %v987 = vunpack.c.l.b16 %v274
    %v988 = vunpack.c.h.b16 %v274
    %v989 = vunpack.c.l.b16 %v275
    %v990 = vunpack.c.h.b16 %v275
    %v991 = vunpack.c.l.b16 %v276
    %v992 = vunpack.c.h.b16 %v276
    %v993 = vunpack.c.l.b16 %v277
    %v994 = vunpack.c.h.b16 %v277
    %v995 = vunpack.c.l.b16 %v278
    %v996 = vunpack.c.h.b16 %v278
    %v997 = vunpack.c.l.b16 %v279
    %v998 = vunpack.c.h.b16 %v279
    %v999 = vunpack.c.l.b16 %v280
    %v1000 = vunpack.c.h.b16 %v280
    %v1001 = vunpack.c.l.b16 %v281
    %v1002 = vunpack.c.h.b16 %v281
    %v1003 = vunpack.c.l.b16 %v282
    %v1004 = vunpack.c.h.b16 %v282
    %v1005 = vunpack.c.l.b16 %v283
    %v1006 = vunpack.c.h.b16 %v283
    %v1007 = vunpack.c.l.b16 %v284
    %v1008 = vunpack.c.h.b16 %v284
    %v1009 = vunpack.c.l.b16 %v285
    %v1010 = vunpack.c.h.b16 %v285
    %v1011 = vunpack.c.l.b16 %v286
    %v1012 = vunpack.c.h.b16 %v286
    %v1013 = vunpack.c.l.b16 %v287
    %v1014 = vunpack.c.h.b16 %v287
    %v1015 = vunpack.c.l.b16 %v288
    %v1016 = vunpack.c.h.b16 %v288
    %v1017 = vunpack.c.l.b16 %v289
    %v1018 = vunpack.c.h.b16 %v289
    %v1019 = vunpack.c.l.b16 %v290
    %v1020 = vunpack.c.h.b16 %v290
    %v1021 = vunpack.c.l.b16 %v291
    %v1022 = vunpack.c.h.b16 %v291
    %v1023 = vunpack.c.l.b16 %v292
    %v1024 = vunpack.c.h.b16 %v292
    %v1025 = vunpack.c.l.b16 %v293
    %v1026 = vunpack.c.h.b16 %v293
    %v1027 = vunpack.c.l.b16 %v294
    %v1028 = vunpack.c.h.b16 %v294
    %v1029 = vunpack.c.l.b16 %v295
    %v1030 = vunpack.c.h.b16 %v295
    %v1031 = vunpack.c.l.b16 %v296
    %v1032 = vunpack.c.h.b16 %v296
    %v1033 = vunpack.c.l.b16 %v297
    %v1034 = vunpack.c.h.b16 %v297
    %v1035 = vunpack.c.l.b16 %v298
    %v1036 = vunpack.c.h.b16 %v298
    %v1037 = vunpack.c.l.b16 %v299
    %v1038 = vunpack.c.h.b16 %v299
    %v1039 = vunpack.c.l.b16 %v300
    %v1040 = vunpack.c.h.b16 %v300
    %v1041 = vunpack.c.l.b16 %v301
    %v1042 = vunpack.c.h.b16 %v301
    %v1043 = vunpack.c.l.b16 %v302
    %v1044 = vunpack.c.h.b16 %v302
    %v1045 = vunpack.c.l.b16 %v303
    %v1046 = vunpack.c.h.b16 %v303
    %v1047 = vunpack.c.l.b16 %v304
    %v1048 = vunpack.c.h.b16 %v304
    %v1049 = vunpack.c.l.b16 %v305
    %v1050 = vunpack.c.h.b16 %v305
    %v1051 = vunpack.c.l.b16 %v306
    %v1052 = vunpack.c.h.b16 %v306
    %v1053 = vunpack.c.l.b16 %v307
    %v1054 = vunpack.c.h.b16 %v307
    %v1055 = vunpack.c.l.b16 %v308
    %v1056 = vunpack.c.h.b16 %v308
    %v1057 = vunpack.c.l.b16 %v309
    %v1058 = vunpack.c.h.b16 %v309
    %v1059 = vunpack.c.l.b16 %v310
    %v1060 = vunpack.c.h.b16 %v310
    %v1061 = vunpack.c.l.b16 %v311
    %v1062 = vunpack.c.h.b16 %v311
    %v1063 = vunpack.c.l.b16 %v312
    %v1064 = vunpack.c.h.b16 %v312
    %v1065 = vunpack.c.l.b16 %v313
    %v1066 = vunpack.c.h.b16 %v313
    %v1067 = vunpack.c.l.b16 %v314
    %v1068 = vunpack.c.h.b16 %v314
    %v1069 = vunpack.c.l.b16 %v315
    %v1070 = vunpack.c.h.b16 %v315
    %v1071 = vunpack.c.l.b16 %v316
    %v1072 = vunpack.c.h.b16 %v316
    %v1073 = vunpack.c.l.b16 %v317
    %v1074 = vunpack.c.h.b16 %v317
    %v1075 = vunpack.c.l.b16 %v318
    %v1076 = vunpack.c.h.b16 %v318
    %v1077 = vunpack.c.l.b16 %v319
    %v1078 = vunpack.c.h.b16 %v319
    %v1079 = vunpack.c.l.b16 %v320
    %v1080 = vunpack.c.h.b16 %v320
    %v1081 = vunpack.c.l.b16 %v321
    %v1082 = vunpack.c.h.b16 %v321
    %v1083 = vunpack.c.l.b16 %v322
    %v1084 = vunpack.c.h.b16 %v322
    %v1085 = vunpack.c.l.b16 %v323
    %v1086 = vunpack.c.h.b16 %v323
    %v1087 = vunpack.c.l.b16 %v324
    %v1088 = vunpack.c.h.b16 %v324
    %v1089 = vunpack.c.l.b16 %v325
    %v1090 = vunpack.c.h.b16 %v325
    %v1091 = vunpack.c.l.b16 %v326
    %v1092 = vunpack.c.h.b16 %v326
    %v1093 = vunpack.c.l.b16 %v327
    %v1094 = vunpack.c.h.b16 %v327
    %v1095 = vunpack.c.l.b16 %v328
    %v1096 = vunpack.c.h.b16 %v328
    %v1097 = vunpack.c.l.b16 %v329
    %v1098 = vunpack.c.h.b16 %v329
    %v1099 = vunpack.c.l.b16 %v330
    %v1100 = vunpack.c.h.b16 %v330
    %v1101 = vunpack.c.l.b16 %v331
    %v1102 = vunpack.c.h.b16 %v331
    %v1103 = vunpack.c.l.b16 %v332
    %v1104 = vunpack.c.h.b16 %v332
    %v1105 = vunpack.c.l.b16 %v333
    %v1106 = vunpack.c.h.b16 %v333
    %v1107 = vunpack.c.l.b16 %v334
    %v1108 = vunpack.c.h.b16 %v334
    %v1109 = vunpack.c.l.b16 %v335
    %v1110 = vunpack.c.h.b16 %v335
    %v1111 = vunpack.c.l.b16 %v336
    %v1112 = vunpack.c.h.b16 %v336
    %v1113 = vunpack.c.l.b16 %v337
    %v1114 = vunpack.c.h.b16 %v337
    %v1115 = vunpack.c.l.b16 %v338
    %v1116 = vunpack.c.h.b16 %v338
    %v1117 = vunpack.c.l.b16 %v339
    %v1118 = vunpack.c.h.b16 %v339
    %v1119 = vunpack.c.l.b16 %v340
    %v1120 = vunpack.c.h.b16 %v340
    %v1121 = vunpack.c.l.b16 %v341
    %v1122 = vunpack.c.h.b16 %v341
    %v1123 = vunpack.c.l.b16 %v342
    %v1124 = vunpack.c.h.b16 %v342
    %v1125 = vunpack.c.l.b16 %v343
    %v1126 = vunpack.c.h.b16 %v343
    %v1127 = vunpack.c.l.b16 %v344
    %v1128 = vunpack.c.h.b16 %v344
    %v1129 = vunpack.c.l.b16 %v345
    %v1130 = vunpack.c.h.b16 %v345
    %v1131 = vunpack.c.l.b16 %v346
    %v1132 = vunpack.c.h.b16 %v346
    %v1133 = vunpack.c.l.b16 %v347
    %v1134 = vunpack.c.h.b16 %v347
    %v1135 = vunpack.c.l.b16 %v348
    %v1136 = vunpack.c.h.b16 %v348
    %v1137 = vunpack.c.l.b16 %v349
    %v1138 = vunpack.c.h.b16 %v349
    %v1139 = vunpack.c.l.b16 %v350
    %v1140 = vunpack.c.h.b16 %v350
    %v1141 = vpack.c.b16 %v633, %v629
    %v1142 = vpack.c.b16 %v634, %v630
    %v1143 = vpack.c.b16 %v635, %v631
    %v1144 = vpack.c.b16 %v636, %v632
    %v1145 = vpack.c.b16 %v641, %v637
    %v1146 = vpack.c.b16 %v642, %v638
    %v1147 = vpack.c.b16 %v643, %v639
    %v1148 = vpack.c.b16 %v644, %v640
    %v1149 = vpack.c.b16 %v649, %v645
    %v1150 = vpack.c.b16 %v650, %v646
    %v1151 = vpack.c.b16 %v651, %v647
    %v1152 = vpack.c.b16 %v652, %v648
    %v1153 = vpack.c.b16 %v657, %v653
    %v1154 = vpack.c.b16 %v658, %v654
    %v1155 = vpack.c.b16 %v659, %v655
    %v1156 = vpack.c.b16 %v660, %v656
    %v1157 = vpack.c.b16 %v665, %v661
    %v1158 = vpack.c.b16 %v666, %v662
    %v1159 = vpack.c.b16 %v667, %v663
    %v1160 = vpack.c.b16 %v668, %v664
    %v1161 = vpack.c.b16 %v673, %v669
    %v1162 = vpack.c.b16 %v674, %v670
    %v1163 = vpack.c.b16 %v675, %v671
    %v1164 = vpack.c.b16 %v676, %v672
    %v1165 = vpack.c.b16 %v681, %v677
    %v1166 = vpack.c.b16 %v682, %v678
    %v1167 = vpack.c.b16 %v683, %v679
    %v1168 = vpack.c.b16 %v684, %v680
    %v1169 = vpack.c.b16 %v689, %v685
    %v1170 = vpack.c.b16 %v690, %v686
    %v1171 = vpack.c.b16 %v691, %v687
    %v1172 = vpack.c.b16 %v692, %v688
    %v1173 = vpack.c.b16 %v697, %v693
    %v1174 = vpack.c.b16 %v698, %v694
    %v1175 = vpack.c.b16 %v699, %v695
    %v1176 = vpack.c.b16 %v700, %v696
    %v1177 = vpack.c.b16 %v705, %v701
    %v1178 = vpack.c.b16 %v706, %v702
    %v1179 = vpack.c.b16 %v707, %v703
    %v1180 = vpack.c.b16 %v708, %v704
    %v1181 = vpack.c.b16 %v713, %v709
    %v1182 = vpack.c.b16 %v714, %v710
    %v1183 = vpack.c.b16 %v715, %v711
    %v1184 = vpack.c.b16 %v716, %v712
    %v1185 = vpack.c.b16 %v721, %v717
    %v1186 = vpack.c.b16 %v722, %v718
    %v1187 = vpack.c.b16 %v723, %v719
    %v1188 = vpack.c.b16 %v724, %v720
    %v1189 = vpack.c.b16 %v729, %v725
    %v1190 = vpack.c.b16 %v730, %v726
    %v1191 = vpack.c.b16 %v731, %v727
    %v1192 = vpack.c.b16 %v732, %v728
    %v1193 = vpack.c.b16 %v737, %v733
    %v1194 = vpack.c.b16 %v738, %v734
    %v1195 = vpack.c.b16 %v739, %v735
    %v1196 = vpack.c.b16 %v740, %v736
    %v1197 = vpack.c.b16 %v745, %v741
    %v1198 = vpack.c.b16 %v746, %v742
    %v1199 = vpack.c.b16 %v747, %v743
    %v1200 = vpack.c.b16 %v748, %v744
    %v1201 = vpack.c.b16 %v753, %v749
    %v1202 = vpack.c.b16 %v754, %v750
    %v1203 = vpack.c.b16 %v755, %v751
    %v1204 = vpack.c.b16 %v756, %v752
    %v1205 = vpack.c.b16 %v761, %v757
    %v1206 = vpack.c.b16 %v762, %v758
    %v1207 = vpack.c.b16 %v763, %v759
    %v1208 = vpack.c.b16 %v764, %v760
    %v1209 = vpack.c.b16 %v769, %v765
    %v1210 = vpack.c.b16 %v770, %v766
    %v1211 = vpack.c.b16 %v771, %v767
    %v1212 = vpack.c.b16 %v772, %v768
    %v1213 = vpack.c.b16 %v777, %v773
    %v1214 = vpack.c.b16 %v778, %v774
    %v1215 = vpack.c.b16 %v779, %v775
    %v1216 = vpack.c.b16 %v780, %v776
    %v1217 = vpack.c.b16 %v785, %v781
    %v1218 = vpack.c.b16 %v786, %v782
    %v1219 = vpack.c.b16 %v787, %v783
    %v1220 = vpack.c.b16 %v788, %v784
    %v1221 = vpack.c.b16 %v793, %v789
    %v1222 = vpack.c.b16 %v794, %v790
    %v1223 = vpack.c.b16 %v795, %v791
    %v1224 = vpack.c.b16 %v796, %v792
    %v1225 = vpack.c.b16 %v801, %v797
    %v1226 = vpack.c.b16 %v802, %v798
    %v1227 = vpack.c.b16 %v803, %v799
    %v1228 = vpack.c.b16 %v804, %v800
    %v1229 = vpack.c.b16 %v809, %v805
    %v1230 = vpack.c.b16 %v810, %v806
    %v1231 = vpack.c.b16 %v811, %v807
    %v1232 = vpack.c.b16 %v812, %v808
    %v1233 = vpack.c.b16 %v817, %v813
    %v1234 = vpack.c.b16 %v818, %v814
    %v1235 = vpack.c.b16 %v819, %v815
    %v1236 = vpack.c.b16 %v820, %v816
    %v1237 = vpack.c.b16 %v825, %v821
    %v1238 = vpack.c.b16 %v826, %v822
    %v1239 = vpack.c.b16 %v827, %v823
    %v1240 = vpack.c.b16 %v828, %v824
    %v1241 = vpack.c.b16 %v833, %v829
    %v1242 = vpack.c.b16 %v834, %v830
    %v1243 = vpack.c.b16 %v835, %v831
    %v1244 = vpack.c.b16 %v836, %v832
    %v1245 = vpack.c.b16 %v841, %v837
    %v1246 = vpack.c.b16 %v842, %v838
    %v1247 = vpack.c.b16 %v843, %v839
    %v1248 = vpack.c.b16 %v844, %v840
    %v1249 = vpack.c.b16 %v849, %v845
    %v1250 = vpack.c.b16 %v850, %v846
    %v1251 = vpack.c.b16 %v851, %v847
    %v1252 = vpack.c.b16 %v852, %v848
    %v1253 = vpack.c.b16 %v857, %v853
    %v1254 = vpack.c.b16 %v858, %v854
    %v1255 = vpack.c.b16 %v859, %v855
    %v1256 = vpack.c.b16 %v860, %v856
    %v1257 = vpack.c.b16 %v865, %v861
    %v1258 = vpack.c.b16 %v866, %v862
    %v1259 = vpack.c.b16 %v867, %v863
    %v1260 = vpack.c.b16 %v868, %v864
    %v1261 = vpack.c.b16 %v873, %v869
    %v1262 = vpack.c.b16 %v874, %v870
    %v1263 = vpack.c.b16 %v875, %v871
    %v1264 = vpack.c.b16 %v876, %v872
    %v1265 = vpack.c.b16 %v881, %v877
    %v1266 = vpack.c.b16 %v882, %v878
    %v1267 = vpack.c.b16 %v883, %v879
    %v1268 = vpack.c.b16 %v884, %v880
    %v1269 = vpack.c.b16 %v889, %v885
    %v1270 = vpack.c.b16 %v890, %v886
    %v1271 = vpack.c.b16 %v891, %v887
    %v1272 = vpack.c.b16 %v892, %v888
    %v1273 = vpack.c.b16 %v897, %v893
    %v1274 = vpack.c.b16 %v898, %v894
    %v1275 = vpack.c.b16 %v899, %v895
    %v1276 = vpack.c.b16 %v900, %v896
    %v1277 = vpack.c.b16 %v905, %v901
    %v1278 = vpack.c.b16 %v906, %v902
    %v1279 = vpack.c.b16 %v907, %v903
    %v1280 = vpack.c.b16 %v908, %v904
    %v1281 = vpack.c.b16 %v913, %v909
    %v1282 = vpack.c.b16 %v914, %v910
    %v1283 = vpack.c.b16 %v915, %v911
    %v1284 = vpack.c.b16 %v916, %v912
    %v1285 = vpack.c.b16 %v921, %v917
    %v1286 = vpack.c.b16 %v922, %v918
    %v1287 = vpack.c.b16 %v923, %v919
    %v1288 = vpack.c.b16 %v924, %v920
    %v1289 = vpack.c.b16 %v929, %v925
    %v1290 = vpack.c.b16 %v930, %v926
    %v1291 = vpack.c.b16 %v931, %v927
    %v1292 = vpack.c.b16 %v932, %v928
    %v1293 = vpack.c.b16 %v937, %v933
    %v1294 = vpack.c.b16 %v938, %v934
    %v1295 = vpack.c.b16 %v939, %v935
    %v1296 = vpack.c.b16 %v940, %v936
    %v1297 = vpack.c.b16 %v945, %v941
    %v1298 = vpack.c.b16 %v946, %v942
    %v1299 = vpack.c.b16 %v947, %v943
    %v1300 = vpack.c.b16 %v948, %v944
    %v1301 = vpack.c.b16 %v953, %v949
    %v1302 = vpack.c.b16 %v954, %v950
    %v1303 = vpack.c.b16 %v955, %v951
    %v1304 = vpack.c.b16 %v956, %v952
    %v1305 = vpack.c.b16 %v961, %v957
    %v1306 = vpack.c.b16 %v962, %v958
    %v1307 = vpack.c.b16 %v963, %v959
    %v1308 = vpack.c.b16 %v964, %v960
    %v1309 = vpack.c.b16 %v969, %v965
    %v1310 = vpack.c.b16 %v970, %v966
    %v1311 = vpack.c.b16 %v971, %v967
    %v1312 = vpack.c.b16 %v972, %v968
    %v1313 = vpack.c.b16 %v977, %v973
    %v1314 = vpack.c.b16 %v978, %v974
    %v1315 = vpack.c.b16 %v979, %v975
    %v1316 = vpack.c.b16 %v980, %v976
    %v1317 = vpack.c.b16 %v985, %v981
    %v1318 = vpack.c.b16 %v986, %v982
    %v1319 = vpack.c.b16 %v987, %v983
    %v1320 = vpack.c.b16 %v988, %v984
    %v1321 = vpack.c.b16 %v993, %v989
    %v1322 = vpack.c.b16 %v994, %v990
    %v1323 = vpack.c.b16 %v995, %v991
    %v1324 = vpack.c.b16 %v996, %v992
    %v1325 = vpack.c.b16 %v1001, %v997
    %v1326 = vpack.c.b16 %v1002, %v998
    %v1327 = vpack.c.b16 %v1003, %v999
    %v1328 = vpack.c.b16 %v1004, %v1000
    %v1329 = vpack.c.b16 %v1009, %v1005
    %v1330 = vpack.c.b16 %v1010, %v1006
    %v1331 = vpack.c.b16 %v1011, %v1007
    %v1332 = vpack.c.b16 %v1012, %v1008
    %v1333 = vpack.c.b16 %v1017, %v1013
    %v1334 = vpack.c.b16 %v1018, %v1014
    %v1335 = vpack.c.b16 %v1019, %v1015
    %v1336 = vpack.c.b16 %v1020, %v1016
    %v1337 = vpack.c.b16 %v1025, %v1021
    %v1338 = vpack.c.b16 %v1026, %v1022
    %v1339 = vpack.c.b16 %v1027, %v1023
    %v1340 = vpack.c.b16 %v1028, %v1024
    %v1341 = vpack.c.b16 %v1033, %v1029
    %v1342 = vpack.c.b16 %v1034, %v1030
    %v1343 = vpack.c.b16 %v1035, %v1031
    %v1344 = vpack.c.b16 %v1036, %v1032
    %v1345 = vpack.c.b16 %v1041, %v1037
    %v1346 = vpack.c.b16 %v1042, %v1038
    %v1347 = vpack.c.b16 %v1043, %v1039
    %v1348 = vpack.c.b16 %v1044, %v1040
    %v1349 = vpack.c.b16 %v1049, %v1045
    %v1350 = vpack.c.b16 %v1050, %v1046
    %v1351 = vpack.c.b16 %v1051, %v1047
    %v1352 = vpack.c.b16 %v1052, %v1048
    %v1353 = vpack.c.b16 %v1057, %v1053
    %v1354 = vpack.c.b16 %v1058, %v1054
    %v1355 = vpack.c.b16 %v1059, %v1055
    %v1356 = vpack.c.b16 %v1060, %v1056
    %v1357 = vpack.c.b16 %v1065, %v1061
    %v1358 = vpack.c.b16 %v1066, %v1062
    %v1359 = vpack.c.b16 %v1067, %v1063
    %v1360 = vpack.c.b16 %v1068, %v1064
    %v1361 = vpack.c.b16 %v1073, %v1069
    %v1362 = vpack.c.b16 %v1074, %v1070
    %v1363 = vpack.c.b16 %v1075, %v1071
    %v1364 = vpack.c.b16 %v1076, %v1072
    %v1365 = vpack.c.b16 %v1081, %v1077
    %v1366 = vpack.c.b16 %v1082, %v1078
    %v1367 = vpack.c.b16 %v1083, %v1079
    %v1368 = vpack.c.b16 %v1084, %v1080
    %v1369 = vpack.c.b16 %v1089, %v1085
    %v1370 = vpack.c.b16 %v1090, %v1086
    %v1371 = vpack.c.b16 %v1091, %v1087
    %v1372 = vpack.c.b16 %v1092, %v1088
    %v1373 = vpack.c.b16 %v1097, %v1093
    %v1374 = vpack.c.b16 %v1098, %v1094
    %v1375 = vpack.c.b16 %v1099, %v1095
    %v1376 = vpack.c.b16 %v1100, %v1096
    %v1377 = vpack.c.b16 %v1105, %v1101
    %v1378 = vpack.c.b16 %v1106, %v1102
    %v1379 = vpack.c.b16 %v1107, %v1103
    %v1380 = vpack.c.b16 %v1108, %v1104
    %v1381 = vpack.c.b16 %v1113, %v1109
    %v1382 = vpack.c.b16 %v1114, %v1110
    %v1383 = vpack.c.b16 %v1115, %v1111
    %v1384 = vpack.c.b16 %v1116, %v1112
    %v1385 = vpack.c.b16 %v1121, %v1117
    %v1386 = vpack.c.b16 %v1122, %v1118
    %v1387 = vpack.c.b16 %v1123, %v1119
    %v1388 = vpack.c.b16 %v1124, %v1120
    %v1389 = vpack.c.b16 %v1129, %v1125
    %v1390 = vpack.c.b16 %v1130, %v1126
    %v1391 = vpack.c.b16 %v1131, %v1127
    %v1392 = vpack.c.b16 %v1132, %v1128
    %v1393 = vpack.c.b16 %v1137, %v1133
    %v1394 = vpack.c.b16 %v1138, %v1134
    %v1395 = vpack.c.b16 %v1139, %v1135
    %v1396 = vpack.c.b16 %v1140, %v1136
    %1653 = vmatprep.subr.bf16.mxu0 %v1142
    %1654 = vmatpush1.bf16.msra.mxu0 %v1141
    %1655 = vmatprep.subr.bf16.mxu0 %v1146
    %1656 = vmatpush1.bf16.msra.mxu0 %v1145
    %1657 = vmatprep.subr.bf16.mxu0 %v1150
    %1658 = vmatpush1.bf16.msra.mxu0 %v1149
    %1659 = vmatprep.subr.bf16.mxu0 %v1154
    %1660 = vmatpush1.bf16.msra.mxu0 %v1153
    %1661 = vmatprep.subr.bf16.mxu0 %v1158
    %1662 = vmatpush1.bf16.msra.mxu0 %v1157
    %1663 = vmatprep.subr.bf16.mxu0 %v1162
    %1664 = vmatpush1.bf16.msra.mxu0 %v1161
    %1665 = vmatprep.subr.bf16.mxu0 %v1166
    %1666 = vmatpush1.bf16.msra.mxu0 %v1165
    %1667 = vmatprep.subr.bf16.mxu0 %v1170
    %1668 = vmatpush1.bf16.msra.mxu0 %v1169
    %1669 = vmatprep.subr.bf16.mxu0 %v1174
    %1670 = vmatpush1.bf16.msra.mxu0 %v1173
    %1671 = vmatprep.subr.bf16.mxu0 %v1178
    %1672 = vmatpush1.bf16.msra.mxu0 %v1177
    %1673 = vmatprep.subr.bf16.mxu0 %v1182
    %1674 = vmatpush1.bf16.msra.mxu0 %v1181
    %1675 = vmatprep.subr.bf16.mxu0 %v1186
    %1676 = vmatpush1.bf16.msra.mxu0 %v1185
    %1677 = vmatprep.subr.bf16.mxu0 %v1190
    %1678 = vmatpush1.bf16.msra.mxu0 %v1189
    %1679 = vmatprep.subr.bf16.mxu0 %v1194
    %1680 = vmatpush1.bf16.msra.mxu0 %v1193
    %1681 = vmatprep.subr.bf16.mxu0 %v1198
    %1682 = vmatpush1.bf16.msra.mxu0 %v1197
    %1683 = vmatprep.subr.bf16.mxu0 %v1202
    %1684 = vmatpush1.bf16.msra.mxu0 %v1201
    %1685 = vmatprep.mubr.bf16.mxu0 %v88
    %1686 = vmatmul.mubr.bf16.gmra.mrb[0].mxu0 %v87
    %v1687 = vpop.f32.mrb[0].mxu0
    %v1688 = vadd.f32 %v356, %v1687
    %v1689 = vpop.f32.mrb[0].mxu0
    %v1690 = vadd.f32 %v360, %v1689
    %v1691 = vpop.f32.mrb[0].mxu0
    %v1692 = vpop.f32.mrb[0].mxu0
    %1693 = vdwg.mxu0
    %1694 = vmatprep.subr.bf16.mxu0 %v1206
    %1695 = vmatpush1.bf16.msra.mxu0 %v1205
    %1696 = vmatprep.subr.bf16.mxu0 %v1210
    %1697 = vmatpush1.bf16.msra.mxu0 %v1209
    %1698 = vmatprep.subr.bf16.mxu0 %v1214
    %1699 = vmatpush1.bf16.msra.mxu0 %v1213
    %1700 = vmatprep.subr.bf16.mxu0 %v1218
    %1701 = vmatpush1.bf16.msra.mxu0 %v1217
    %1702 = vmatprep.subr.bf16.mxu0 %v1222
    %1703 = vmatpush1.bf16.msra.mxu0 %v1221
    %1704 = vmatprep.subr.bf16.mxu0 %v1226
    %1705 = vmatpush1.bf16.msra.mxu0 %v1225
    %1706 = vmatprep.subr.bf16.mxu0 %v1230
    %1707 = vmatpush1.bf16.msra.mxu0 %v1229
    %1708 = vmatprep.subr.bf16.mxu0 %v1234
    %1709 = vmatpush1.bf16.msra.mxu0 %v1233
    %1710 = vmatprep.subr.bf16.mxu0 %v1238
    %1711 = vmatpush1.bf16.msra.mxu0 %v1237
    %1712 = vmatprep.subr.bf16.mxu0 %v1242
    %1713 = vmatpush1.bf16.msra.mxu0 %v1241
    %1714 = vmatprep.subr.bf16.mxu0 %v1246
    %1715 = vmatpush1.bf16.msra.mxu0 %v1245
    %1716 = vmatprep.subr.bf16.mxu0 %v1250
    %1717 = vmatpush1.bf16.msra.mxu0 %v1249
    %1718 = vmatprep.subr.bf16.mxu0 %v1254
    %1719 = vmatpush1.bf16.msra.mxu0 %v1253
    %1720 = vmatprep.subr.bf16.mxu0 %v1258
    %1721 = vmatpush1.bf16.msra.mxu0 %v1257
    %1722 = vmatprep.subr.bf16.mxu0 %v1262
    %1723 = vmatpush1.bf16.msra.mxu0 %v1261
    %1724 = vmatprep.subr.bf16.mxu0 %v1266
    %1725 = vmatpush1.bf16.msra.mxu0 %v1265
    %1726 = vmatprep.mubr.bf16.mxu0 %v90
    %1727 = vmatmul.mubr.bf16.gmra.mrb[0].mxu0 %v89
    %v1728 = vpop.f32.mrb[0].mxu0
    %v1729 = vadd.f32 %v1688, %v1728
    %v1730 = vpop.f32.mrb[0].mxu0
    %v1731 = vadd.f32 %v1690, %v1730
    %v1732 = vpop.f32.mrb[0].mxu0
    %v1733 = vpop.f32.mrb[0].mxu0
    %1734 = vdwg.mxu0
    %1735 = vmatprep.subr.bf16.mxu0 %v1270
    %1736 = vmatpush1.bf16.msra.mxu0 %v1269
    %1737 = vmatprep.subr.bf16.mxu0 %v1274
    %1738 = vmatpush1.bf16.msra.mxu0 %v1273
    %1739 = vmatprep.subr.bf16.mxu0 %v1278
    %1740 = vmatpush1.bf16.msra.mxu0 %v1277
    %1741 = vmatprep.subr.bf16.mxu0 %v1282
    %1742 = vmatpush1.bf16.msra.mxu0 %v1281
    %1743 = vmatprep.subr.bf16.mxu0 %v1286
    %1744 = vmatpush1.bf16.msra.mxu0 %v1285
    %1745 = vmatprep.subr.bf16.mxu0 %v1290
    %1746 = vmatpush1.bf16.msra.mxu0 %v1289
    %1747 = vmatprep.subr.bf16.mxu0 %v1294
    %1748 = vmatpush1.bf16.msra.mxu0 %v1293
    %1749 = vmatprep.subr.bf16.mxu0 %v1298
    %1750 = vmatpush1.bf16.msra.mxu0 %v1297
    %1751 = vmatprep.subr.bf16.mxu0 %v1302
    %1752 = vmatpush1.bf16.msra.mxu0 %v1301
    %1753 = vmatprep.subr.bf16.mxu0 %v1306
    %1754 = vmatpush1.bf16.msra.mxu0 %v1305
    %1755 = vmatprep.subr.bf16.mxu0 %v1310
    %1756 = vmatpush1.bf16.msra.mxu0 %v1309
    %1757 = vmatprep.subr.bf16.mxu0 %v1314
    %1758 = vmatpush1.bf16.msra.mxu0 %v1313
    %1759 = vmatprep.subr.bf16.mxu0 %v1318
    %1760 = vmatpush1.bf16.msra.mxu0 %v1317
    %1761 = vmatprep.subr.bf16.mxu0 %v1322
    %1762 = vmatpush1.bf16.msra.mxu0 %v1321
    %1763 = vmatprep.subr.bf16.mxu0 %v1326
    %1764 = vmatpush1.bf16.msra.mxu0 %v1325
    %1765 = vmatprep.subr.bf16.mxu0 %v1330
    %1766 = vmatpush1.bf16.msra.mxu0 %v1329
    %1767 = vmatprep.mubr.bf16.mxu0 %v92
    %1768 = vmatmul.mubr.bf16.gmra.mrb[0].mxu0 %v91
    %v1769 = vpop.f32.mrb[0].mxu0
    %v1770 = vadd.f32 %v1729, %v1769
    %v1771 = vpop.f32.mrb[0].mxu0
    %v1772 = vadd.f32 %v1731, %v1771
    %v1773 = vpop.f32.mrb[0].mxu0
    %v1774 = vpop.f32.mrb[0].mxu0
    %1775 = vdwg.mxu0
    %1776 = vmatprep.subr.bf16.mxu0 %v1334
    %1777 = vmatpush1.bf16.msra.mxu0 %v1333
    %1778 = vmatprep.subr.bf16.mxu0 %v1338
    %1779 = vmatpush1.bf16.msra.mxu0 %v1337
    %1780 = vmatprep.subr.bf16.mxu0 %v1342
    %1781 = vmatpush1.bf16.msra.mxu0 %v1341
    %1782 = vmatprep.subr.bf16.mxu0 %v1346
    %1783 = vmatpush1.bf16.msra.mxu0 %v1345
    %1784 = vmatprep.subr.bf16.mxu0 %v1350
    %1785 = vmatpush1.bf16.msra.mxu0 %v1349
    %1786 = vmatprep.subr.bf16.mxu0 %v1354
    %1787 = vmatpush1.bf16.msra.mxu0 %v1353
    %1788 = vmatprep.subr.bf16.mxu0 %v1358
    %1789 = vmatpush1.bf16.msra.mxu0 %v1357
    %1790 = vmatprep.subr.bf16.mxu0 %v1362
    %1791 = vmatpush1.bf16.msra.mxu0 %v1361
    %1792 = vmatprep.subr.bf16.mxu0 %v1366
    %1793 = vmatpush1.bf16.msra.mxu0 %v1365
    %1794 = vmatprep.subr.bf16.mxu0 %v1370
    %1795 = vmatpush1.bf16.msra.mxu0 %v1369
    %1796 = vmatprep.subr.bf16.mxu0 %v1374
    %1797 = vmatpush1.bf16.msra.mxu0 %v1373
    %1798 = vmatprep.subr.bf16.mxu0 %v1378
    %1799 = vmatpush1.bf16.msra.mxu0 %v1377
    %1800 = vmatprep.subr.bf16.mxu0 %v1382
    %1801 = vmatpush1.bf16.msra.mxu0 %v1381
    %1802 = vmatprep.subr.bf16.mxu0 %v1386
    %1803 = vmatpush1.bf16.msra.mxu0 %v1385
    %1804 = vmatprep.subr.bf16.mxu0 %v1390
    %1805 = vmatpush1.bf16.msra.mxu0 %v1389
    %1806 = vmatprep.subr.bf16.mxu0 %v1394
    %1807 = vmatpush1.bf16.msra.mxu0 %v1393
    %1808 = vmatprep.mubr.bf16.mxu0 %v94
    %1809 = vmatmul.mubr.bf16.gmra.mrb[0].mxu0 %v93
    %v1810 = vpop.f32.mrb[0].mxu0
    %v1811 = vadd.f32 %v1770, %v1810
    %v1812 = vpop.f32.mrb[0].mxu0
    %v1813 = vadd.f32 %v1772, %v1812
    %v1814 = vpop.f32.mrb[0].mxu0
    %v1815 = vpop.f32.mrb[0].mxu0
    %1816 = vdwg.mxu0
    %1817 = vmatprep.subr.bf16.mxu0 %v1144
    %1818 = vmatpush1.bf16.msra.mxu0 %v1143
    %1819 = vmatprep.subr.bf16.mxu0 %v1148
    %1820 = vmatpush1.bf16.msra.mxu0 %v1147
    %1821 = vmatprep.subr.bf16.mxu0 %v1152
    %1822 = vmatpush1.bf16.msra.mxu0 %v1151
    %1823 = vmatprep.subr.bf16.mxu0 %v1156
    %1824 = vmatpush1.bf16.msra.mxu0 %v1155
    %1825 = vmatprep.subr.bf16.mxu0 %v1160
    %1826 = vmatpush1.bf16.msra.mxu0 %v1159
    %1827 = vmatprep.subr.bf16.mxu0 %v1164
    %1828 = vmatpush1.bf16.msra.mxu0 %v1163
    %1829 = vmatprep.subr.bf16.mxu0 %v1168
    %1830 = vmatpush1.bf16.msra.mxu0 %v1167
    %1831 = vmatprep.subr.bf16.mxu0 %v1172
    %1832 = vmatpush1.bf16.msra.mxu0 %v1171
    %1833 = vmatprep.subr.bf16.mxu0 %v1176
    %1834 = vmatpush1.bf16.msra.mxu0 %v1175
    %1835 = vmatprep.subr.bf16.mxu0 %v1180
    %1836 = vmatpush1.bf16.msra.mxu0 %v1179
    %1837 = vmatprep.subr.bf16.mxu0 %v1184
    %1838 = vmatpush1.bf16.msra.mxu0 %v1183
    %1839 = vmatprep.subr.bf16.mxu0 %v1188
    %1840 = vmatpush1.bf16.msra.mxu0 %v1187
    %1841 = vmatprep.subr.bf16.mxu0 %v1192
    %1842 = vmatpush1.bf16.msra.mxu0 %v1191
    %1843 = vmatprep.subr.bf16.mxu0 %v1196
    %1844 = vmatpush1.bf16.msra.mxu0 %v1195
    %1845 = vmatprep.subr.bf16.mxu0 %v1200
    %1846 = vmatpush1.bf16.msra.mxu0 %v1199
    %1847 = vmatprep.subr.bf16.mxu0 %v1204
    %1848 = vmatpush1.bf16.msra.mxu0 %v1203
    %1849 = vmatprep.mubr.bf16.mxu0 %v88
    %1850 = vmatmul.mubr.bf16.gmra.mrb[0].mxu0 %v87
    %v1851 = vpop.f32.mrb[0].mxu0
    %v1852 = vadd.f32 %v364, %v1851
    %v1853 = vpop.f32.mrb[0].mxu0
    %v1854 = vadd.f32 %v368, %v1853
    %v1855 = vpop.f32.mrb[0].mxu0
    %v1856 = vpop.f32.mrb[0].mxu0
    %1857 = vdwg.mxu0
    %1858 = vmatprep.subr.bf16.mxu0 %v1208
    %1859 = vmatpush1.bf16.msra.mxu0 %v1207
    %1860 = vmatprep.subr.bf16.mxu0 %v1212
    %1861 = vmatpush1.bf16.msra.mxu0 %v1211
    %1862 = vmatprep.subr.bf16.mxu0 %v1216
    %1863 = vmatpush1.bf16.msra.mxu0 %v1215
    %1864 = vmatprep.subr.bf16.mxu0 %v1220
    %1865 = vmatpush1.bf16.msra.mxu0 %v1219
    %1866 = vmatprep.subr.bf16.mxu0 %v1224
    %1867 = vmatpush1.bf16.msra.mxu0 %v1223
    %1868 = vmatprep.subr.bf16.mxu0 %v1228
    %1869 = vmatpush1.bf16.msra.mxu0 %v1227
    %1870 = vmatprep.subr.bf16.mxu0 %v1232
    %1871 = vmatpush1.bf16.msra.mxu0 %v1231
    %1872 = vmatprep.subr.bf16.mxu0 %v1236
    %1873 = vmatpush1.bf16.msra.mxu0 %v1235
    %1874 = vmatprep.subr.bf16.mxu0 %v1240
    %1875 = vmatpush1.bf16.msra.mxu0 %v1239
    %1876 = vmatprep.subr.bf16.mxu0 %v1244
    %1877 = vmatpush1.bf16.msra.mxu0 %v1243
    %1878 = vmatprep.subr.bf16.mxu0 %v1248
    %1879 = vmatpush1.bf16.msra.mxu0 %v1247
    %1880 = vmatprep.subr.bf16.mxu0 %v1252
    %1881 = vmatpush1.bf16.msra.mxu0 %v1251
    %1882 = vmatprep.subr.bf16.mxu0 %v1256
    %1883 = vmatpush1.bf16.msra.mxu0 %v1255
    %1884 = vmatprep.subr.bf16.mxu0 %v1260
    %1885 = vmatpush1.bf16.msra.mxu0 %v1259
    %1886 = vmatprep.subr.bf16.mxu0 %v1264
    %1887 = vmatpush1.bf16.msra.mxu0 %v1263
    %1888 = vmatprep.subr.bf16.mxu0 %v1268
    %1889 = vmatpush1.bf16.msra.mxu0 %v1267
    %1890 = vmatprep.mubr.bf16.mxu0 %v90
    %1891 = vmatmul.mubr.bf16.gmra.mrb[0].mxu0 %v89
    %v1892 = vpop.f32.mrb[0].mxu0
    %v1893 = vadd.f32 %v1852, %v1892
    %v1894 = vpop.f32.mrb[0].mxu0
    %v1895 = vadd.f32 %v1854, %v1894
    %v1896 = vpop.f32.mrb[0].mxu0
    %v1897 = vpop.f32.mrb[0].mxu0
    %1898 = vdwg.mxu0
    %1899 = vmatprep.subr.bf16.mxu0 %v1272
    %1900 = vmatpush1.bf16.msra.mxu0 %v1271
    %1901 = vmatprep.subr.bf16.mxu0 %v1276
    %1902 = vmatpush1.bf16.msra.mxu0 %v1275
    %1903 = vmatprep.subr.bf16.mxu0 %v1280
    %1904 = vmatpush1.bf16.msra.mxu0 %v1279
    %1905 = vmatprep.subr.bf16.mxu0 %v1284
    %1906 = vmatpush1.bf16.msra.mxu0 %v1283
    %1907 = vmatprep.subr.bf16.mxu0 %v1288
    %1908 = vmatpush1.bf16.msra.mxu0 %v1287
    %1909 = vmatprep.subr.bf16.mxu0 %v1292
    %1910 = vmatpush1.bf16.msra.mxu0 %v1291
    %1911 = vmatprep.subr.bf16.mxu0 %v1296
    %1912 = vmatpush1.bf16.msra.mxu0 %v1295
    %1913 = vmatprep.subr.bf16.mxu0 %v1300
    %1914 = vmatpush1.bf16.msra.mxu0 %v1299
    %1915 = vmatprep.subr.bf16.mxu0 %v1304
    %1916 = vmatpush1.bf16.msra.mxu0 %v1303
    %1917 = vmatprep.subr.bf16.mxu0 %v1308
    %1918 = vmatpush1.bf16.msra.mxu0 %v1307
    %1919 = vmatprep.subr.bf16.mxu0 %v1312
    %1920 = vmatpush1.bf16.msra.mxu0 %v1311
    %1921 = vmatprep.subr.bf16.mxu0 %v1316
    %1922 = vmatpush1.bf16.msra.mxu0 %v1315
    %1923 = vmatprep.subr.bf16.mxu0 %v1320
    %1924 = vmatpush1.bf16.msra.mxu0 %v1319
    %1925 = vmatprep.subr.bf16.mxu0 %v1324
    %1926 = vmatpush1.bf16.msra.mxu0 %v1323
    %1927 = vmatprep.subr.bf16.mxu0 %v1328
    %1928 = vmatpush1.bf16.msra.mxu0 %v1327
    %1929 = vmatprep.subr.bf16.mxu0 %v1332
    %1930 = vmatpush1.bf16.msra.mxu0 %v1331
    %1931 = vmatprep.mubr.bf16.mxu0 %v92
    %1932 = vmatmul.mubr.bf16.gmra.mrb[0].mxu0 %v91
    %v1933 = vpop.f32.mrb[0].mxu0
    %v1934 = vadd.f32 %v1893, %v1933
    %v1935 = vpop.f32.mrb[0].mxu0
    %v1936 = vadd.f32 %v1895, %v1935
    %v1937 = vpop.f32.mrb[0].mxu0
    %v1938 = vpop.f32.mrb[0].mxu0
    %1939 = vdwg.mxu0
    %1940 = vmatprep.subr.bf16.mxu0 %v1336
    %1941 = vmatpush1.bf16.msra.mxu0 %v1335
    %1942 = vmatprep.subr.bf16.mxu0 %v1340
    %1943 = vmatpush1.bf16.msra.mxu0 %v1339
    %1944 = vmatprep.subr.bf16.mxu0 %v1344
    %1945 = vmatpush1.bf16.msra.mxu0 %v1343
    %1946 = vmatprep.subr.bf16.mxu0 %v1348
    %1947 = vmatpush1.bf16.msra.mxu0 %v1347
    %1948 = vmatprep.subr.bf16.mxu0 %v1352
    %1949 = vmatpush1.bf16.msra.mxu0 %v1351
    %1950 = vmatprep.subr.bf16.mxu0 %v1356
    %1951 = vmatpush1.bf16.msra.mxu0 %v1355
    %1952 = vmatprep.subr.bf16.mxu0 %v1360
    %1953 = vmatpush1.bf16.msra.mxu0 %v1359
    %1954 = vmatprep.subr.bf16.mxu0 %v1364
    %1955 = vmatpush1.bf16.msra.mxu0 %v1363
    %1956 = vmatprep.subr.bf16.mxu0 %v1368
    %1957 = vmatpush1.bf16.msra.mxu0 %v1367
    %1958 = vmatprep.subr.bf16.mxu0 %v1372
    %1959 = vmatpush1.bf16.msra.mxu0 %v1371
    %1960 = vmatprep.subr.bf16.mxu0 %v1376
    %1961 = vmatpush1.bf16.msra.mxu0 %v1375
    %1962 = vmatprep.subr.bf16.mxu0 %v1380
    %1963 = vmatpush1.bf16.msra.mxu0 %v1379
    %1964 = vmatprep.subr.bf16.mxu0 %v1384
    %1965 = vmatpush1.bf16.msra.mxu0 %v1383
    %1966 = vmatprep.subr.bf16.mxu0 %v1388
    %1967 = vmatpush1.bf16.msra.mxu0 %v1387
    %1968 = vmatprep.subr.bf16.mxu0 %v1392
    %1969 = vmatpush1.bf16.msra.mxu0 %v1391
    %1970 = vmatprep.subr.bf16.mxu0 %v1396
    %1971 = vmatpush1.bf16.msra.mxu0 %v1395
    %1972 = vmatprep.mubr.bf16.mxu0 %v94
    %1973 = vmatmul.mubr.bf16.gmra.mrb[0].mxu0 %v93
    %v1974 = vpop.f32.mrb[0].mxu0
    %v1975 = vadd.f32 %v1934, %v1974
    %v1976 = vpop.f32.mrb[0].mxu0
    %v1977 = vadd.f32 %v1936, %v1976
    %v1978 = vpop.f32.mrb[0].mxu0
    %v1979 = vpop.f32.mrb[0].mxu0
    %1980 = vdwg.mxu0
    %v1981 = vmax.f32 %v1811, 0.0
    %v1982 = vmax.f32 %v1813, 0.0
    %v1983 = vmax.f32 %v1975, 0.0
    %v1984 = vmax.f32 %v1977, 0.0
    %v1989 = vcombine.low %v1981, %v1982
    %v1990 = vcombine.low %v1983, %v1984
    %v1992 = vunpack.c.l.s4 1983009808
    %v1993 = vunpack.c.0.s8 %v1992
    %v1994 = vlaneseq
    %v1995 = vshrl.u32 %v1994, 7
    %v1996 = vsub.s32 %v1993, %v1995
    %v1997 = vrot.slane %v1989, %v1996
    %v1999 = vunpack.c.l.s4 1983009808
    %v2000 = vunpack.c.0.s8 %v1999
    %v2001 = vlaneseq
    %v2002 = vshrl.u32 %v2001, 7
    %v2003 = vsub.s32 %v2000, %v2002
    %v2004 = vrot.slane %v1990, %v2003
    %v2005 = vcombine.low %v1997, %v2004
    %2007 = vst [vmem:[#allocation7] sm:$0xff] %v2005
    // Predicated region
    $region22: #{linear_relu_pallas.1} parent=1 // pred_check
      _
    $region23: #{linear_relu_pallas.1} parent=1 // pred_check_branch
      %2009 = sbr.rel (0) target = $region25
    $region24: #{linear_relu_pallas.1} parent=1 // pred_region
      %s2011 = ssub.s32 128, 128
      %2012 = vsyncadd [#allocation4], %s2011
      %s2014 = sshll.u32 [#allocation7], 4
      %s2015 = int_to_ptr.vmem [resolvable:$true] %s2014
      %2017 = dma.vmem_to_hbm [thread:$0]  %s2015, 128, %s3, [#allocation4]
    $region25: #{linear_relu_pallas.1} parent=1 // pred_fallthru
      _
    // Predicated region
    $region26: #{linear_relu_pallas.1} parent=1 // pred_check
      _
    $region27: #{linear_relu_pallas.1} parent=1 // pred_check_branch
      %2019 = sbr.rel (0) target = $region29
    $region28: #{linear_relu_pallas.1} parent=1 // pred_region
      %2020 = dma.done [#allocation4], 128
    $region29: #{linear_relu_pallas.1} parent=1 // pred_fallthru
      _
    %2021 = vsyncpa [#allocation3], 1
    %2022 = vsyncpa [#allocation6], 1
    %2023 = vsyncpa [#allocation4], 1

</llo_original>
